<compile_context>
chip_gen: v6e
topology: v6e:2x2x1
jax: 0.10.0
libtpu: 0.0.40
codegen_flags: <defaults>
</compile_context>

<pallas_src>
import functools

import numpy as np
import jax
import jax.numpy as jnp
from jax.experimental import pallas as pl
from jax.experimental.pallas import tpu as pltpu

PRIMITIVES = ['none', 'max_pool_3x3', 'avg_pool_3x3', 'skip_connect',
              'sep_conv_3x3', 'sep_conv_5x5', 'dil_conv_3x3', 'dil_conv_5x5']

_VMEM = pl.BlockSpec(memory_space=pltpu.MemorySpace.VMEM)
_LANES = 128
_BN_EPS = 1e-5


def _round_up(v, m):
    return ((v + m - 1) // m) * m


# ----------------------------- Pallas kernels -----------------------------


def _mm_fused_kernel(a_ref, b_ref, o_ref, acc_ref, *, relu_in, bn, relu_out):
    """Fused [ReLU] -> matmul -> [BatchNorm(affine=False)] -> [ReLU].

    grid = (N tiles "parallel", K tiles "arbitrary"); fp32 accumulator scratch
    is initialized at k==0 and flushed (with the BN/ReLU epilogue) at the last
    K step.  Rows (M) stay whole because training-mode BN needs full-column
    statistics.
    """
    k = pl.program_id(1)

    @pl.when(k == 0)
    def _():
        acc_ref[...] = jnp.zeros_like(acc_ref)

    a = a_ref[...]
    if relu_in:
        # elementwise in fp32 (safe on v5e's non-bf16 VPU); MXU stays bf16
        a = jnp.maximum(a.astype(jnp.float32), 0.0).astype(a_ref.dtype)
    acc_ref[...] += jnp.dot(a, b_ref[...], preferred_element_type=jnp.float32)

    @pl.when(k == pl.num_programs(1) - 1)
    def _():
        y = acc_ref[...]
        if bn:
            # per-channel (column) stats over all rows (= N*H*W), biased var.
            # zero-padded columns normalize to exactly 0 (no NaN).
            mean = jnp.mean(y, axis=0, keepdims=True)
            var = jnp.mean((y - mean) ** 2, axis=0, keepdims=True)
            y = (y - mean) * jax.lax.rsqrt(var + _BN_EPS)
        if relu_out:
            y = jnp.maximum(y, 0.0)
        o_ref[...] = y


@functools.partial(jax.jit, static_argnames=("relu_in", "bn", "relu_out"))
def fused_matmul(a, b, *, relu_in=False, bn=False, relu_out=False):
    """out = [relu_out][BN]( [relu_in](a) @ b ), tiled over (N, K)."""
    M, K = a.shape
    _, N = b.shape
    TN = _LANES
    Np = _round_up(N, TN)                 # lane-dense output tiles
    if K <= 512:                          # single resident K tile (typical)
        TK, Kp = K, K
    else:                                 # pipeline K in 256-wide tiles
        TK = 256
        Kp = _round_up(K, TK)
    a = a.astype(jnp.bfloat16)            # bf16 MXU inputs, fp32 accumulate
    b = b.astype(jnp.bfloat16)
    if Kp != K:
        a = jnp.pad(a, ((0, 0), (0, Kp - K)))
        b = jnp.pad(b, ((0, Kp - K), (0, 0)))
    if Np != N:
        b = jnp.pad(b, ((0, 0), (0, Np - N)))
    grid = (Np // TN, Kp // TK)
    kernel = functools.partial(_mm_fused_kernel, relu_in=relu_in, bn=bn,
                               relu_out=relu_out)
    out = pl.pallas_call(
        kernel,
        out_shape=jax.ShapeDtypeStruct((M, Np), jnp.float32),
        grid_spec=pltpu.PrefetchScalarGridSpec(
            num_scalar_prefetch=0,
            grid=grid,
            in_specs=[pl.BlockSpec((M, TK), lambda n, k: (0, k)),
                      pl.BlockSpec((TK, TN), lambda n, k: (k, n))],
            out_specs=pl.BlockSpec((M, TN), lambda n, k: (0, n)),
            scratch_shapes=[pltpu.VMEM((M, TN), jnp.float32)]),
        compiler_params=pltpu.CompilerParams(
            dimension_semantics=("parallel", "arbitrary")),
    )(a, b)
    return out[:, :N] if Np != N else out


def _tap_wsum_kernel(p_ref, w_ref, o_ref, *, relu_in):
    # p: (K, R, L), w: (K, L)  ->  o[R, L] = sum_k [relu](p[k]) * w[k]
    K = p_ref.shape[0]
    acc = jnp.zeros(o_ref.shape, jnp.float32)
    for k in range(K):
        t = p_ref[k]
        if relu_in:
            t = jnp.maximum(t, 0.0)
        acc = acc + t * w_ref[k:k + 1, :]
    o_ref[...] = acc


def _lane_group_bn(acc, g):
    # per-channel (channel = lane % C) BN stats on a lane-dense (R, 128)
    # layout via the lane-group averaging matrix g (MXU op, XLU-free).
    mean = jnp.dot(jnp.mean(acc, axis=0, keepdims=True), g,
                   preferred_element_type=jnp.float32)
    dev = acc - mean
    var = jnp.dot(jnp.mean(dev * dev, axis=0, keepdims=True), g,
                  preferred_element_type=jnp.float32)
    return dev * jax.lax.rsqrt(var + _BN_EPS)


def _max_pool_bn_kernel(p_ref, g_ref, o_ref):
    K = p_ref.shape[0]
    acc = p_ref[0]
    for k in range(1, K):
        acc = jnp.maximum(acc, p_ref[k])
    o_ref[...] = _lane_group_bn(acc, g_ref[...])


def _avg_pool_bn_kernel(p_ref, s_ref, g_ref, o_ref):
    K = p_ref.shape[0]
    acc = p_ref[0]
    for k in range(1, K):
        acc = acc + p_ref[k]
    o_ref[...] = _lane_group_bn(acc * s_ref[...], g_ref[...])


# Fallback kernels (only used when lane-dense packing is not possible).
def _tap_max_kernel(p_ref, o_ref):
    K = p_ref.shape[0]
    acc = p_ref[0]
    for k in range(1, K):
        acc = jnp.maximum(acc, p_ref[k])
    o_ref[...] = acc


def _bn_cols_kernel(x_ref, o_ref):
    x = x_ref[...]
    mean = jnp.mean(x, axis=0, keepdims=True)
    var = jnp.mean((x - mean) ** 2, axis=0, keepdims=True)
    o_ref[...] = (x - mean) * jax.lax.rsqrt(var + _BN_EPS)


def _pool_linear_kernel(p_ref, x_ref, w_ref, b_ref, o_ref):
    # global average pool (as a tiny matmul with the pooling matrix p) fused
    # with the classifier linear layer.
    pooled = jnp.dot(p_ref[...], x_ref[...], preferred_element_type=jnp.float32)
    o_ref[...] = (jnp.dot(pooled, w_ref[...],
                          preferred_element_type=jnp.float32) + b_ref[...])


# ----------------------------- kernel wrappers -----------------------------


@functools.partial(jax.jit, static_argnames=("relu_in",))
def pallas_tap_wsum(p, w, relu_in=False):
    _, R, L = p.shape
    return pl.pallas_call(
        functools.partial(_tap_wsum_kernel, relu_in=relu_in),
        in_specs=[_VMEM, _VMEM], out_specs=_VMEM,
        out_shape=jax.ShapeDtypeStruct((R, L), jnp.float32),
    )(p, w)


@jax.jit
def pallas_max_pool_bn(p, g):
    _, R, L = p.shape
    return pl.pallas_call(
        _max_pool_bn_kernel,
        in_specs=[_VMEM, _VMEM], out_specs=_VMEM,
        out_shape=jax.ShapeDtypeStruct((R, L), jnp.float32),
    )(p, g)


@jax.jit
def pallas_avg_pool_bn(p, s, g):
    _, R, L = p.shape
    return pl.pallas_call(
        _avg_pool_bn_kernel,
        in_specs=[_VMEM, _VMEM, _VMEM], out_specs=_VMEM,
        out_shape=jax.ShapeDtypeStruct((R, L), jnp.float32),
    )(p, s, g)


@jax.jit
def pallas_tap_max(p):
    _, M, C = p.shape
    return pl.pallas_call(
        _tap_max_kernel,
        in_specs=[_VMEM], out_specs=_VMEM,
        out_shape=jax.ShapeDtypeStruct((M, C), jnp.float32),
    )(p)


@jax.jit
def pallas_bn_cols(x2d):
    return pl.pallas_call(
        _bn_cols_kernel,
        in_specs=[_VMEM], out_specs=_VMEM,
        out_shape=jax.ShapeDtypeStruct(x2d.shape, jnp.float32),
    )(x2d)


@jax.jit
def pallas_pool_linear(pool_mat, x_flat, w, b):
    B = pool_mat.shape[0]
    N = w.shape[1]
    return pl.pallas_call(
        _pool_linear_kernel,
        in_specs=[_VMEM, _VMEM, _VMEM, _VMEM], out_specs=_VMEM,
        out_shape=jax.ShapeDtypeStruct((B, N), jnp.float32),
    )(pool_mat, x_flat, w, b)


# ----------------------------- NN ops (JAX glue around Pallas) -------------


def extract_patches(x, kh, kw, stride, padding, dilation=1, pad_value=0.0,
                    tap_axis=0):
    """x: (B,H,W,C) -> taps stacked at `tap_axis` (no transposes needed)."""
    B, H, W, C = x.shape
    xp = jnp.pad(x, ((0, 0), (padding, padding), (padding, padding), (0, 0)),
                 constant_values=pad_value)
    Hout = (H + 2 * padding - dilation * (kh - 1) - 1) // stride + 1
    Wout = (W + 2 * padding - dilation * (kw - 1) - 1) // stride + 1
    taps = []
    for i in range(kh):
        for j in range(kw):
            hi, wj = i * dilation, j * dilation
            taps.append(xp[:, hi:hi + stride * Hout:stride,
                            wj:wj + stride * Wout:stride, :])
    return jnp.stack(taps, axis=tap_axis), Hout, Wout


def _lane_pack_ok(M, C):
    return (_LANES % C == 0) and ((M * C) % _LANES == 0)


@functools.lru_cache(maxsize=None)
def _group_avg_matrix(C, L=_LANES):
    idx = np.arange(L)
    g = (idx[:, None] % C == idx[None, :] % C).astype(np.float32) / (L // C)
    return jnp.asarray(g)


def conv1x1_bn(x, w, *, relu_in=False, relu_out=False):
    """[ReLU] -> 1x1 conv -> BN -> [ReLU] as one fused matmul (no im2col)."""
    B, H, W, Cin = x.shape
    cout = w.shape[-1]
    y = fused_matmul(x.reshape(B * H * W, Cin), w.reshape(Cin, cout),
                     relu_in=relu_in, bn=True, relu_out=relu_out)
    return y.reshape(B, H, W, cout)


def conv_kxk_bn(x, w, stride, padding):
    """Dense KxK conv + BN (stem): tap-stacked im2col + fused matmul."""
    kh, kw, cin, cout = w.shape
    p, Ho, Wo = extract_patches(x, kh, kw, stride, padding, 1, 0.0, tap_axis=3)
    B = x.shape[0]
    a = p.reshape(B * Ho * Wo, kh * kw * cin)
    y = fused_matmul(a, w.reshape(kh * kw * cin, cout), bn=True)
    return y.reshape(B, Ho, Wo, cout)


def depthwise_conv(x, w, stride, padding, dilation, relu_in=False):
    """Depthwise conv (weight (kh,kw,C)) as a lane-dense tap-reduce kernel."""
    kh, kw, C = w.shape
    p, Ho, Wo = extract_patches(x, kh, kw, stride, padding, dilation, 0.0)
    B = x.shape[0]
    M = B * Ho * Wo
    K = kh * kw
    wf = w.reshape(K, C)
    if _lane_pack_ok(M, C):
        R = (M * C) // _LANES
        out = pallas_tap_wsum(p.reshape(K, R, _LANES),
                              jnp.tile(wf, (1, _LANES // C)), relu_in=relu_in)
    else:
        out = pallas_tap_wsum(p.reshape(K, M, C), wf, relu_in=relu_in)
    return out.reshape(B, Ho, Wo, C)


def max_pool3_bn(x, stride):
    """MaxPool2d(3, stride, padding=1) + BN(affine=False), fused."""
    B, H, W, C = x.shape
    p, Ho, Wo = extract_patches(x, 3, 3, stride, 1, 1, pad_value=-1e30)
    M = B * Ho * Wo
    if _lane_pack_ok(M, C):
        R = (M * C) // _LANES
        out = pallas_max_pool_bn(p.reshape(9, R, _LANES), _group_avg_matrix(C))
    else:
        out = pallas_bn_cols(pallas_tap_max(p.reshape(9, M, C)))
    return out.reshape(B, Ho, Wo, C)


def avg_pool3_bn(x, stride):
    """AvgPool2d(3, stride, padding=1, count_include_pad=False) + BN, fused."""
    B, H, W, C = x.shape
    p, Ho, Wo = extract_patches(x, 3, 3, stride, 1, 1, 0.0)
    ones = jnp.ones((1, H, W, 1), jnp.float32)
    pc, _, _ = extract_patches(ones, 3, 3, stride, 1, 1, 0.0)
    inv = 1.0 / jnp.sum(pc, axis=0)                      # (1, Ho, Wo, 1)
    M = B * Ho * Wo
    if _lane_pack_ok(M, C):
        R = (M * C) // _LANES
        s = jnp.broadcast_to(inv, (B, Ho, Wo, C)).reshape(R, _LANES)
        out = pallas_avg_pool_bn(p.reshape(9, R, _LANES), s,
                                 _group_avg_matrix(C))
    else:
        ssum = pallas_tap_wsum(p.reshape(9, M, C), jnp.ones((9, C), jnp.float32))
        out = pallas_bn_cols((ssum.reshape(B, Ho, Wo, C) * inv).reshape(M, C))
    return out.reshape(B, Ho, Wo, C)


def factorized_reduce(x, w1, w2):
    """ReLU -> [1x1/s2 conv | 1x1/s2 conv(odd offset)] -> concat -> BN.

    Lowered to ONE fused matmul with a block-diagonal weight (the two strided
    input views are concatenated along K)."""
    B, H, W, Cin = x.shape
    x1 = x[:, ::2, ::2, :]
    x2 = x[:, 1::2, 1::2, :]
    Ho, Wo = x1.shape[1], x1.shape[2]
    M = B * Ho * Wo
    a = jnp.concatenate([x1.reshape(M, Cin), x2.reshape(M, Cin)], axis=1)
    c1 = w1.reshape(Cin, -1)
    c2 = w2.reshape(Cin, -1)
    half = c1.shape[1]
    z = jnp.zeros((Cin, half), jnp.float32)
    wbd = jnp.concatenate([jnp.concatenate([c1, z], axis=1),
                           jnp.concatenate([z, c2], axis=1)], axis=0)
    y = fused_matmul(a, wbd, relu_in=True, bn=True)
    return y.reshape(B, Ho, Wo, 2 * half)


# ----------------------------- DARTS ops / cells ---------------------------


class ParamGen:
    def __init__(self, seed=0):
        self._key = jax.random.PRNGKey(seed)

    def _next(self):
        self._key, sub = jax.random.split(self._key)
        return sub

    def conv(self, kh, kw, cin, cout):
        fan_in = kh * kw * cin
        return (jax.random.normal(self._next(), (kh, kw, cin, cout), jnp.float32)
                / np.sqrt(fan_in))

    def dwconv(self, kh, kw, c):
        return (jax.random.normal(self._next(), (kh, kw, c), jnp.float32)
                / np.sqrt(kh * kw))

    def linear(self, cin, cout):
        w = jax.random.normal(self._next(), (cin, cout), jnp.float32) / np.sqrt(cin)
        b = jnp.zeros((1, cout), jnp.float32)
        return w, b

    def uniform(self, shape, scale):
        return scale * jax.random.uniform(self._next(), shape, jnp.float32)


def init_mixed_op(pg, C, stride):
    ops = []
    for prim in PRIMITIVES:
        if prim in ('none', 'max_pool_3x3', 'avg_pool_3x3'):
            p = None
        elif prim == 'skip_connect':
            p = None if stride == 1 else {'conv1': pg.conv(1, 1, C, C // 2),
                                          'conv2': pg.conv(1, 1, C, C // 2)}
        elif prim.startswith('sep_conv'):
            k = 3 if prim.endswith('3x3') else 5
            p = {'dw1': pg.dwconv(k, k, C), 'pw1': pg.conv(1, 1, C, C),
                 'dw2': pg.dwconv(k, k, C), 'pw2': pg.conv(1, 1, C, C)}
        elif prim.startswith('dil_conv'):
            k = 3 if prim.endswith('3x3') else 5
            p = {'dw': pg.dwconv(k, k, C), 'pw': pg.conv(1, 1, C, C)}
        ops.append((prim, p))
    return {'stride': stride, 'ops': ops}


def apply_op(prim, p, x, stride):
    if prim == 'max_pool_3x3':
        return max_pool3_bn(x, stride)
    if prim == 'avg_pool_3x3':
        return avg_pool3_bn(x, stride)
    if prim == 'skip_connect':
        return x if stride == 1 else factorized_reduce(x, p['conv1'], p['conv2'])
    if prim.startswith('sep_conv'):
        k = 3 if prim.endswith('3x3') else 5
        pad = (k - 1) // 2
        y = depthwise_conv(x, p['dw1'], stride, pad, 1, relu_in=True)
        y = conv1x1_bn(y, p['pw1'], relu_in=False, relu_out=True)
        y = depthwise_conv(y, p['dw2'], 1, pad, 1, relu_in=False)
        return conv1x1_bn(y, p['pw2'], relu_in=False)
    if prim.startswith('dil_conv'):
        k = 3 if prim.endswith('3x3') else 5
        pad = k - 1                                   # dilation = 2
        y = depthwise_conv(x, p['dw'], stride, pad, 2, relu_in=True)
        return conv1x1_bn(y, p['pw'], relu_in=False)
    raise ValueError(prim)


def apply_mixed_op(mp, x, w_row):
    acc = None
    for pos, (prim, p) in enumerate(mp['ops']):
        if prim == 'none':
            continue                    # contributes exactly w * 0
        out = w_row[pos] * apply_op(prim, p, x, mp['stride'])
        acc = out if acc is None else acc + out
    return acc


def init_cell(pg, steps, multiplier, Cpp, Cp, C, reduction, reduction_prev):
    cell = {'reduction': reduction, 'steps': steps, 'multiplier': multiplier}
    if reduction_prev:
        cell['pre0'] = {'type': 'fr',
                        'conv1': pg.conv(1, 1, Cpp, C // 2),
                        'conv2': pg.conv(1, 1, Cpp, C // 2)}
    else:
        cell['pre0'] = {'type': 'rcb', 'w': pg.conv(1, 1, Cpp, C)}
    cell['pre1'] = {'type': 'rcb', 'w': pg.conv(1, 1, Cp, C)}
    ops = []
    for i in range(steps):
        for j in range(2 + i):
            stride = 2 if reduction and j < 2 else 1
            ops.append(init_mixed_op(pg, C, stride))
    cell['ops'] = ops
    return cell


def apply_preprocess(pp, x):
    if pp['type'] == 'fr':
        return factorized_reduce(x, pp['conv1'], pp['conv2'])
    return conv1x1_bn(x, pp['w'], relu_in=True)        # ReLUConvBN(1x1)


def apply_cell(cell, s0, s1, weights):
    s0 = apply_preprocess(cell['pre0'], s0)
    s1 = apply_preprocess(cell['pre1'], s1)
    states = [s0, s1]
    offset = 0
    for _ in range(cell['steps']):
        s = None
        for j, h in enumerate(states):
            out = apply_mixed_op(cell['ops'][offset + j], h, weights[offset + j])
            s = out if s is None else s + out
        offset += len(states)
        states.append(s)
    return jnp.concatenate(states[-cell['multiplier']:], axis=-1)


# ----------------------------- Network -------------------------------------


def init_network(pg, C=4, num_classes=10, layers=2, steps=2, multiplier=2,
                 stem_multiplier=3):
    net = {'steps': steps, 'multiplier': multiplier}
    C_curr = stem_multiplier * C
    net['stem_w'] = pg.conv(3, 3, 3, C_curr)
    Cpp, Cp, C_curr = C_curr, C_curr, C
    cells = []
    reduction_prev = False
    for i in range(layers):
        if i in [layers // 3, 2 * layers // 3]:
            C_curr *= 2
            reduction = True
        else:
            reduction = False
        cells.append(init_cell(pg, steps, multiplier, Cpp, Cp, C_curr,
                               reduction, reduction_prev))
        reduction_prev = reduction
        Cpp, Cp = Cp, multiplier * C_curr
    net['cells'] = cells
    k = sum(1 for i in range(steps) for _ in range(2 + i))
    num_ops = len(PRIMITIVES)               # arch_flag defaults to all-True
    net['alphas_normal'] = pg.uniform((k, num_ops), 0.001)
    net['alphas_reduce'] = pg.uniform((k, num_ops), 0.001)
    net['cls_w'], net['cls_b'] = pg.linear(Cp, num_classes)
    return net


def network_forward(net, x_nchw):
    # layout: torch NCHW input -> NHWC for all Pallas compute
    x = jnp.transpose(x_nchw, (0, 2, 3, 1)).astype(jnp.float32)
    s = conv_kxk_bn(x, net['stem_w'], 1, 1)            # stem: Conv3x3 + BN fused
    s0 = s1 = s
    w_normal = jax.nn.softmax(net['alphas_normal'], axis=-1)
    w_reduce = jax.nn.softmax(net['alphas_reduce'], axis=-1)
    for cell in net['cells']:
        weights = w_reduce if cell['reduction'] else w_normal
        s0, s1 = s1, apply_cell(cell, s0, s1, weights)
    B, H, W, Cf = s1.shape
    HW = H * W
    # global adaptive avg pool (-> 1x1) fused with the classifier
    pool_mat = jnp.kron(jnp.eye(B, dtype=jnp.float32),
                        jnp.ones((1, HW), jnp.float32)) / HW
    return pallas_pool_linear(pool_mat, s1.reshape(B * HW, Cf),
                              net['cls_w'], net['cls_b'])


if __name__ == "__main__":
    # TODO(synk): BatchNorm uses training-mode batch statistics (the torch
    # module's default mode); running-stat inference mode is not modeled.
    pg = ParamGen(seed=1)
    net = init_network(pg, C=4, num_classes=10, layers=2, steps=2,
                       multiplier=2, stem_multiplier=3)
    x = jax.random.normal(jax.random.PRNGKey(0), (2, 3, 16, 16), jnp.float32)
    logits = network_forward(net, x)
    logits = jax.block_until_ready(logits)
    assert logits.shape == (2, 10)
    assert bool(jnp.all(jnp.isfinite(logits)))
    print("KERNEL_OK")
</pallas_src>

<mosaic_0001>
module attributes {stable_mosaic.version = 11 : i64} {
  func.func @_mm_fused_kernel(%arg0: i32, %arg1: i32, %arg2: memref<512x27xbf16, #tpu.memory_space<vmem>>, %arg3: memref<27x128xbf16, #tpu.memory_space<vmem>>, %arg4: memref<512x128xf32, #tpu.memory_space<vmem>>, %arg5: memref<512x128xf32, #tpu.memory_space<vmem>>) attributes {dimension_semantics = [#tpu.dimension_semantics<parallel>, #tpu.dimension_semantics<arbitrary>], iteration_bounds = array<i64: 1, 1>, scalar_prefetch = 0 : i64, scratch_operands = 1 : i64, tpu.core_type = #tpu.core_type<tc>, window_params = [{transform_indices = @transform_0, window_bounds = array<i64: 512, 27>}, {transform_indices = @transform_1, window_bounds = array<i64: 27, 128>}, {transform_indices = @transform_2, window_bounds = array<i64: 512, 128>}]} {
    %c0_i32 = arith.constant 0 : i32
    %0 = arith.cmpi eq, %arg1, %c0_i32 : i32
    %1 = arith.extui %0 : i1 to i32
    %c0_i32_0 = arith.constant 0 : i32
    %2 = arith.cmpi ne, %1, %c0_i32_0 : i32
    scf.if %2 {
      %cst_10 = arith.constant 0.000000e+00 : f32
      %12 = vector.broadcast %cst_10 : f32 to vector<512x128xf32>
      %c0_11 = arith.constant 0 : index
      %c0_12 = arith.constant 0 : index
      %13 = vector.load %arg5[%c0_11, %c0_12] : memref<512x128xf32, #tpu.memory_space<vmem>>, vector<512x128xf32>
      tpu.vector_store %arg5[%c0_11, %c0_12], %12 {strides = array<i32>} : memref<512x128xf32, #tpu.memory_space<vmem>>, vector<512x128xf32>,
    } else {
    }
    %c0 = arith.constant 0 : index
    %c0_1 = arith.constant 0 : index
    %3 = vector.load %arg2[%c0, %c0_1] : memref<512x27xbf16, #tpu.memory_space<vmem>>, vector<512x27xbf16>
    %c0_2 = arith.constant 0 : index
    %c0_3 = arith.constant 0 : index
    %4 = vector.load %arg5[%c0_2, %c0_3] : memref<512x128xf32, #tpu.memory_space<vmem>>, vector<512x128xf32>
    %c0_4 = arith.constant 0 : index
    %c0_5 = arith.constant 0 : index
    %5 = vector.load %arg3[%c0_4, %c0_5] : memref<27x128xbf16, #tpu.memory_space<vmem>>, vector<27x128xbf16>
    %cst = arith.constant dense<0.000000e+00> : vector<512x128xf32>
    %6 = tpu.matmul %3, %5, %cst {dimension_numbers = #tpu.dot_dimension_numbers<[1], [0], [0], [1], [0, 0, 1, 1], [], []>} : vector<512x27xbf16>, vector<27x128xbf16>, vector<512x128xf32> -> vector<512x128xf32>
    %7 = arith.addf %4, %6 : vector<512x128xf32>
    %c0_6 = arith.constant 0 : index
    %c0_7 = arith.constant 0 : index
    %8 = vector.load %arg5[%c0_6, %c0_7] : memref<512x128xf32, #tpu.memory_space<vmem>>, vector<512x128xf32>
    tpu.vector_store %arg5[%c0_6, %c0_7], %7 {strides = array<i32>} : memref<512x128xf32, #tpu.memory_space<vmem>>, vector<512x128xf32>,
    %c0_i32_8 = arith.constant 0 : i32
    %9 = arith.cmpi eq, %arg1, %c0_i32_8 : i32
    %10 = arith.extui %9 : i1 to i32
    %c0_i32_9 = arith.constant 0 : i32
    %11 = arith.cmpi ne, %10, %c0_i32_9 : i32
    scf.if %11 {
      %c0_10 = arith.constant 0 : index
      %c0_11 = arith.constant 0 : index
      %12 = vector.load %arg5[%c0_10, %c0_11] : memref<512x128xf32, #tpu.memory_space<vmem>>, vector<512x128xf32>
      %cst_12 = arith.constant dense<0.000000e+00> : vector<128xf32>
      %13 = vector.multi_reduction <add>, %12, %cst_12 [0] : vector<512x128xf32> to vector<128xf32>
      %14 = vector.shape_cast %13 : vector<128xf32> to vector<1x128xf32>
      %cst_13 = arith.constant 5.120000e+02 : f32
      %15 = vector.broadcast %cst_13 : f32 to vector<1x128xf32>
      %16 = arith.divf %14, %15 : vector<1x128xf32>
      %17 = vector.broadcast %16 : vector<1x128xf32> to vector<512x128xf32>
      %18 = arith.subf %12, %17 : vector<512x128xf32>
      %19 = arith.mulf %18, %18 : vector<512x128xf32>
      %cst_14 = arith.constant dense<0.000000e+00> : vector<128xf32>
      %20 = vector.multi_reduction <add>, %19, %cst_14 [0] : vector<512x128xf32> to vector<128xf32>
      %21 = vector.shape_cast %20 : vector<128xf32> to vector<1x128xf32>
      %cst_15 = arith.constant 5.120000e+02 : f32
      %22 = vector.broadcast %cst_15 : f32 to vector<1x128xf32>
      %23 = arith.divf %21, %22 : vector<1x128xf32>
      %24 = vector.broadcast %16 : vector<1x128xf32> to vector<512x128xf32>
      %25 = arith.subf %12, %24 : vector<512x128xf32>
      %cst_16 = arith.constant 9.99999974E-6 : f32
      %26 = vector.broadcast %cst_16 : f32 to vector<1x128xf32>
      %27 = arith.addf %23, %26 : vector<1x128xf32>
      %28 = math.rsqrt %27 : vector<1x128xf32>
      %29 = vector.broadcast %28 : vector<1x128xf32> to vector<512x128xf32>
      %30 = arith.mulf %25, %29 : vector<512x128xf32>
      %c0_17 = arith.constant 0 : index
      %c0_18 = arith.constant 0 : index
      %31 = vector.load %arg4[%c0_17, %c0_18] : memref<512x128xf32, #tpu.memory_space<vmem>>, vector<512x128xf32>
      tpu.vector_store %arg4[%c0_17, %c0_18], %30 {strides = array<i32>} : memref<512x128xf32, #tpu.memory_space<vmem>>, vector<512x128xf32>,
    } else {
    }
    return
  }
  func.func @transform_0(%arg0: i32, %arg1: i32) -> (i32, i32) {
    %c0_i32 = arith.constant 0 : i32
    %c0_i32_0 = arith.constant 0 : i32
    return %c0_i32, %arg1 : i32, i32
  }
  func.func @transform_1(%arg0: i32, %arg1: i32) -> (i32, i32) {
    %c0_i32 = arith.constant 0 : i32
    return %arg1, %arg0 : i32, i32
  }
  func.func @transform_2(%arg0: i32, %arg1: i32) -> (i32, i32) {
    %c0_i32 = arith.constant 0 : i32
    %c0_i32_0 = arith.constant 0 : i32
    return %c0_i32, %arg0 : i32, i32
  }
}

</mosaic_0001>

<llo_original>
// kernel: fused_matmul.1
$region0: #{fused_matmul.1}
  #allocation0 [shape = 'u32[]', space=smem, size = 0x4, offset = 0x4, fixed_abs, tag = 'smem constant byte address 0x4 - core index']
  #allocation1 [shape = 'u32[144,128]{1,0:T(1,128)}', space=vmem, size = 0x12000, scoped, tag = 'internal scratch']
  #allocation2 [shape = 'f32[512,128]{1,0:T(8,128)}', space=vmem, size = 0x40000, scoped, tag = 'scratch operand']
  %s0 = inlined_call_operand.vmem [shape: bf16[512,27], index: 0, kind: input, shape index: {}]
  %s1 = inlined_call_operand.vmem [shape: bf16[27,128], index: 1, kind: input, shape index: {}]
  %s2 = inlined_call_operand.vmem [shape: f32[512,128], index: 2, kind: output, shape index: {}]
  %s3 = sld [smem:[#allocation0]]
  $region26: #{fused_matmul.1} parent=0
    _
  %s5 = ssub.s32 1, %s3
  %s6 = scalar_select 0, %s5, %s3
  // Predicated region
  $region2: #{fused_matmul.1} parent=0 // pred_check
    _
  $region3: #{fused_matmul.1} parent=0 // pred_check_branch
    %8 = sbr.rel (0) target = $region5
  $region4: #{fused_matmul.1} parent=0 // pred_region
    _
  $region5: #{fused_matmul.1} parent=0 // pred_fallthru
    _
  // Predicated region
  $region6: #{fused_matmul.1} parent=0 // pred_check
    _
  $region7: #{fused_matmul.1} parent=0 // pred_check_branch
    %10 = sbr.rel (0) target = $region9
  $region8: #{fused_matmul.1} parent=0 // pred_region
    _
  $region9: #{fused_matmul.1} parent=0 // pred_fallthru
    _
  %p12 = scmp.eq.s32.totalorder 0, 0
  // Predicated region
  $region10: #{fused_matmul.1} parent=0 // pred_check
    %p13 = pneg %p12
  $region11: #{fused_matmul.1} parent=0 // pred_check_branch
    %15 = sbr.rel (%p13) target = $region13
  $region12: #{fused_matmul.1} parent=0 // pred_region
    %16 = vst [vmem:[#allocation2] sm:$0xff] 0.0
    %17 = vst [vmem:[#allocation2 + $0x8] sm:$0xff] 0.0
    %18 = vst [vmem:[#allocation2 + $0x10] sm:$0xff] 0.0
    %19 = vst [vmem:[#allocation2 + $0x18] sm:$0xff] 0.0
    %20 = vst [vmem:[#allocation2 + $0x20] sm:$0xff] 0.0
    %21 = vst [vmem:[#allocation2 + $0x28] sm:$0xff] 0.0
    %22 = vst [vmem:[#allocation2 + $0x30] sm:$0xff] 0.0
    %23 = vst [vmem:[#allocation2 + $0x38] sm:$0xff] 0.0
    %24 = vst [vmem:[#allocation2 + $0x40] sm:$0xff] 0.0
    %25 = vst [vmem:[#allocation2 + $0x48] sm:$0xff] 0.0
    %26 = vst [vmem:[#allocation2 + $0x50] sm:$0xff] 0.0
    %27 = vst [vmem:[#allocation2 + $0x58] sm:$0xff] 0.0
    %28 = vst [vmem:[#allocation2 + $0x60] sm:$0xff] 0.0
    %29 = vst [vmem:[#allocation2 + $0x68] sm:$0xff] 0.0
    %30 = vst [vmem:[#allocation2 + $0x70] sm:$0xff] 0.0
    %31 = vst [vmem:[#allocation2 + $0x78] sm:$0xff] 0.0
    %32 = vst [vmem:[#allocation2 + $0x80] sm:$0xff] 0.0
    %33 = vst [vmem:[#allocation2 + $0x88] sm:$0xff] 0.0
    %34 = vst [vmem:[#allocation2 + $0x90] sm:$0xff] 0.0
    %35 = vst [vmem:[#allocation2 + $0x98] sm:$0xff] 0.0
    %36 = vst [vmem:[#allocation2 + $0xa0] sm:$0xff] 0.0
    %37 = vst [vmem:[#allocation2 + $0xa8] sm:$0xff] 0.0
    %38 = vst [vmem:[#allocation2 + $0xb0] sm:$0xff] 0.0
    %39 = vst [vmem:[#allocation2 + $0xb8] sm:$0xff] 0.0
    %40 = vst [vmem:[#allocation2 + $0xc0] sm:$0xff] 0.0
    %41 = vst [vmem:[#allocation2 + $0xc8] sm:$0xff] 0.0
    %42 = vst [vmem:[#allocation2 + $0xd0] sm:$0xff] 0.0
    %43 = vst [vmem:[#allocation2 + $0xd8] sm:$0xff] 0.0
    %44 = vst [vmem:[#allocation2 + $0xe0] sm:$0xff] 0.0
    %45 = vst [vmem:[#allocation2 + $0xe8] sm:$0xff] 0.0
    %46 = vst [vmem:[#allocation2 + $0xf0] sm:$0xff] 0.0
    %47 = vst [vmem:[#allocation2 + $0xf8] sm:$0xff] 0.0
    %48 = vst [vmem:[#allocation2 + $0x100] sm:$0xff] 0.0
    %49 = vst [vmem:[#allocation2 + $0x108] sm:$0xff] 0.0
    %50 = vst [vmem:[#allocation2 + $0x110] sm:$0xff] 0.0
    %51 = vst [vmem:[#allocation2 + $0x118] sm:$0xff] 0.0
    %52 = vst [vmem:[#allocation2 + $0x120] sm:$0xff] 0.0
    %53 = vst [vmem:[#allocation2 + $0x128] sm:$0xff] 0.0
    %54 = vst [vmem:[#allocation2 + $0x130] sm:$0xff] 0.0
    %55 = vst [vmem:[#allocation2 + $0x138] sm:$0xff] 0.0
    %56 = vst [vmem:[#allocation2 + $0x140] sm:$0xff] 0.0
    %57 = vst [vmem:[#allocation2 + $0x148] sm:$0xff] 0.0
    %58 = vst [vmem:[#allocation2 + $0x150] sm:$0xff] 0.0
    %59 = vst [vmem:[#allocation2 + $0x158] sm:$0xff] 0.0
    %60 = vst [vmem:[#allocation2 + $0x160] sm:$0xff] 0.0
    %61 = vst [vmem:[#allocation2 + $0x168] sm:$0xff] 0.0
    %62 = vst [vmem:[#allocation2 + $0x170] sm:$0xff] 0.0
    %63 = vst [vmem:[#allocation2 + $0x178] sm:$0xff] 0.0
    %64 = vst [vmem:[#allocation2 + $0x180] sm:$0xff] 0.0
    %65 = vst [vmem:[#allocation2 + $0x188] sm:$0xff] 0.0
    %66 = vst [vmem:[#allocation2 + $0x190] sm:$0xff] 0.0
    %67 = vst [vmem:[#allocation2 + $0x198] sm:$0xff] 0.0
    %68 = vst [vmem:[#allocation2 + $0x1a0] sm:$0xff] 0.0
    %69 = vst [vmem:[#allocation2 + $0x1a8] sm:$0xff] 0.0
    %70 = vst [vmem:[#allocation2 + $0x1b0] sm:$0xff] 0.0
    %71 = vst [vmem:[#allocation2 + $0x1b8] sm:$0xff] 0.0
    %72 = vst [vmem:[#allocation2 + $0x1c0] sm:$0xff] 0.0
    %73 = vst [vmem:[#allocation2 + $0x1c8] sm:$0xff] 0.0
    %74 = vst [vmem:[#allocation2 + $0x1d0] sm:$0xff] 0.0
    %75 = vst [vmem:[#allocation2 + $0x1d8] sm:$0xff] 0.0
    %76 = vst [vmem:[#allocation2 + $0x1e0] sm:$0xff] 0.0
    %77 = vst [vmem:[#allocation2 + $0x1e8] sm:$0xff] 0.0
    %78 = vst [vmem:[#allocation2 + $0x1f0] sm:$0xff] 0.0
    %79 = vst [vmem:[#allocation2 + $0x1f8] sm:$0xff] 0.0
  $region13: #{fused_matmul.1} parent=0 // pred_fallthru
    _
  %v80 = vld [vmem:[%s0] sm:$0xf]
  %v81 = vld [vmem:[%s0 + $0x4] sm:$0xf]
  %v82 = vld [vmem:[%s0 + $0x8] sm:$0xf]
  %v83 = vld [vmem:[%s0 + $0xc] sm:$0xf]
  %v84 = vld [vmem:[%s0 + $0x10] sm:$0xf]
  %v85 = vld [vmem:[%s0 + $0x14] sm:$0xf]
  %v86 = vld [vmem:[%s0 + $0x18] sm:$0xf]
  %v87 = vld [vmem:[%s0 + $0x1c] sm:$0xf]
  %v88 = vld [vmem:[%s0 + $0x20] sm:$0xf]
  %v89 = vld [vmem:[%s0 + $0x24] sm:$0xf]
  %v90 = vld [vmem:[%s0 + $0x28] sm:$0xf]
  %v91 = vld [vmem:[%s0 + $0x2c] sm:$0xf]
  %v92 = vld [vmem:[%s0 + $0x30] sm:$0xf]
  %v93 = vld [vmem:[%s0 + $0x34] sm:$0xf]
  %v94 = vld [vmem:[%s0 + $0x38] sm:$0xf]
  %v95 = vld [vmem:[%s0 + $0x3c] sm:$0xf]
  %v96 = vld [vmem:[%s0 + $0x40] sm:$0xf]
  %v97 = vld [vmem:[%s0 + $0x44] sm:$0xf]
  %v98 = vld [vmem:[%s0 + $0x48] sm:$0xf]
  %v99 = vld [vmem:[%s0 + $0x4c] sm:$0xf]
  %v100 = vld [vmem:[%s0 + $0x50] sm:$0xf]
  %v101 = vld [vmem:[%s0 + $0x54] sm:$0xf]
  %v102 = vld [vmem:[%s0 + $0x58] sm:$0xf]
  %v103 = vld [vmem:[%s0 + $0x5c] sm:$0xf]
  %v104 = vld [vmem:[%s0 + $0x60] sm:$0xf]
  %v105 = vld [vmem:[%s0 + $0x64] sm:$0xf]
  %v106 = vld [vmem:[%s0 + $0x68] sm:$0xf]
  %v107 = vld [vmem:[%s0 + $0x6c] sm:$0xf]
  %v108 = vld [vmem:[%s0 + $0x70] sm:$0xf]
  %v109 = vld [vmem:[%s0 + $0x74] sm:$0xf]
  %v110 = vld [vmem:[%s0 + $0x78] sm:$0xf]
  %v111 = vld [vmem:[%s0 + $0x7c] sm:$0xf]
  %v112 = vld [vmem:[%s0 + $0x80] sm:$0xf]
  %v113 = vld [vmem:[%s0 + $0x84] sm:$0xf]
  %v114 = vld [vmem:[%s0 + $0x88] sm:$0xf]
  %v115 = vld [vmem:[%s0 + $0x8c] sm:$0xf]
  %v116 = vld [vmem:[%s0 + $0x90] sm:$0xf]
  %v117 = vld [vmem:[%s0 + $0x94] sm:$0xf]
  %v118 = vld [vmem:[%s0 + $0x98] sm:$0xf]
  %v119 = vld [vmem:[%s0 + $0x9c] sm:$0xf]
  %v120 = vld [vmem:[%s0 + $0xa0] sm:$0xf]
  %v121 = vld [vmem:[%s0 + $0xa4] sm:$0xf]
  %v122 = vld [vmem:[%s0 + $0xa8] sm:$0xf]
  %v123 = vld [vmem:[%s0 + $0xac] sm:$0xf]
  %v124 = vld [vmem:[%s0 + $0xb0] sm:$0xf]
  %v125 = vld [vmem:[%s0 + $0xb4] sm:$0xf]
  %v126 = vld [vmem:[%s0 + $0xb8] sm:$0xf]
  %v127 = vld [vmem:[%s0 + $0xbc] sm:$0xf]
  %v128 = vld [vmem:[%s0 + $0xc0] sm:$0xf]
  %v129 = vld [vmem:[%s0 + $0xc4] sm:$0xf]
  %v130 = vld [vmem:[%s0 + $0xc8] sm:$0xf]
  %v131 = vld [vmem:[%s0 + $0xcc] sm:$0xf]
  %v132 = vld [vmem:[%s0 + $0xd0] sm:$0xf]
  %v133 = vld [vmem:[%s0 + $0xd4] sm:$0xf]
  %v134 = vld [vmem:[%s0 + $0xd8] sm:$0xf]
  %v135 = vld [vmem:[%s0 + $0xdc] sm:$0xf]
  %v136 = vld [vmem:[%s0 + $0xe0] sm:$0xf]
  %v137 = vld [vmem:[%s0 + $0xe4] sm:$0xf]
  %v138 = vld [vmem:[%s0 + $0xe8] sm:$0xf]
  %v139 = vld [vmem:[%s0 + $0xec] sm:$0xf]
  %v140 = vld [vmem:[%s0 + $0xf0] sm:$0xf]
  %v141 = vld [vmem:[%s0 + $0xf4] sm:$0xf]
  %v142 = vld [vmem:[%s0 + $0xf8] sm:$0xf]
  %v143 = vld [vmem:[%s0 + $0xfc] sm:$0xf]
  %v144 = vld [vmem:[#allocation2] sm:$0xff]
  %v145 = vld [vmem:[#allocation2 + $0x8] sm:$0xff]
  %v146 = vld [vmem:[#allocation2 + $0x10] sm:$0xff]
  %v147 = vld [vmem:[#allocation2 + $0x18] sm:$0xff]
  %v148 = vld [vmem:[#allocation2 + $0x20] sm:$0xff]
  %v149 = vld [vmem:[#allocation2 + $0x28] sm:$0xff]
  %v150 = vld [vmem:[#allocation2 + $0x30] sm:$0xff]
  %v151 = vld [vmem:[#allocation2 + $0x38] sm:$0xff]
  %v152 = vld [vmem:[#allocation2 + $0x40] sm:$0xff]
  %v153 = vld [vmem:[#allocation2 + $0x48] sm:$0xff]
  %v154 = vld [vmem:[#allocation2 + $0x50] sm:$0xff]
  %v155 = vld [vmem:[#allocation2 + $0x58] sm:$0xff]
  %v156 = vld [vmem:[#allocation2 + $0x60] sm:$0xff]
  %v157 = vld [vmem:[#allocation2 + $0x68] sm:$0xff]
  %v158 = vld [vmem:[#allocation2 + $0x70] sm:$0xff]
  %v159 = vld [vmem:[#allocation2 + $0x78] sm:$0xff]
  %v160 = vld [vmem:[#allocation2 + $0x80] sm:$0xff]
  %v161 = vld [vmem:[#allocation2 + $0x88] sm:$0xff]
  %v162 = vld [vmem:[#allocation2 + $0x90] sm:$0xff]
  %v163 = vld [vmem:[#allocation2 + $0x98] sm:$0xff]
  %v164 = vld [vmem:[#allocation2 + $0xa0] sm:$0xff]
  %v165 = vld [vmem:[#allocation2 + $0xa8] sm:$0xff]
  %v166 = vld [vmem:[#allocation2 + $0xb0] sm:$0xff]
  %v167 = vld [vmem:[#allocation2 + $0xb8] sm:$0xff]
  %v168 = vld [vmem:[#allocation2 + $0xc0] sm:$0xff]
  %v169 = vld [vmem:[#allocation2 + $0xc8] sm:$0xff]
  %v170 = vld [vmem:[#allocation2 + $0xd0] sm:$0xff]
  %v171 = vld [vmem:[#allocation2 + $0xd8] sm:$0xff]
  %v172 = vld [vmem:[#allocation2 + $0xe0] sm:$0xff]
  %v173 = vld [vmem:[#allocation2 + $0xe8] sm:$0xff]
  %v174 = vld [vmem:[#allocation2 + $0xf0] sm:$0xff]
  %v175 = vld [vmem:[#allocation2 + $0xf8] sm:$0xff]
  %v176 = vld [vmem:[#allocation2 + $0x100] sm:$0xff]
  %v177 = vld [vmem:[#allocation2 + $0x108] sm:$0xff]
  %v178 = vld [vmem:[#allocation2 + $0x110] sm:$0xff]
  %v179 = vld [vmem:[#allocation2 + $0x118] sm:$0xff]
  %v180 = vld [vmem:[#allocation2 + $0x120] sm:$0xff]
  %v181 = vld [vmem:[#allocation2 + $0x128] sm:$0xff]
  %v182 = vld [vmem:[#allocation2 + $0x130] sm:$0xff]
  %v183 = vld [vmem:[#allocation2 + $0x138] sm:$0xff]
  %v184 = vld [vmem:[#allocation2 + $0x140] sm:$0xff]
  %v185 = vld [vmem:[#allocation2 + $0x148] sm:$0xff]
  %v186 = vld [vmem:[#allocation2 + $0x150] sm:$0xff]
  %v187 = vld [vmem:[#allocation2 + $0x158] sm:$0xff]
  %v188 = vld [vmem:[#allocation2 + $0x160] sm:$0xff]
  %v189 = vld [vmem:[#allocation2 + $0x168] sm:$0xff]
  %v190 = vld [vmem:[#allocation2 + $0x170] sm:$0xff]
  %v191 = vld [vmem:[#allocation2 + $0x178] sm:$0xff]
  %v192 = vld [vmem:[#allocation2 + $0x180] sm:$0xff]
  %v193 = vld [vmem:[#allocation2 + $0x188] sm:$0xff]
  %v194 = vld [vmem:[#allocation2 + $0x190] sm:$0xff]
  %v195 = vld [vmem:[#allocation2 + $0x198] sm:$0xff]
  %v196 = vld [vmem:[#allocation2 + $0x1a0] sm:$0xff]
  %v197 = vld [vmem:[#allocation2 + $0x1a8] sm:$0xff]
  %v198 = vld [vmem:[#allocation2 + $0x1b0] sm:$0xff]
  %v199 = vld [vmem:[#allocation2 + $0x1b8] sm:$0xff]
  %v200 = vld [vmem:[#allocation2 + $0x1c0] sm:$0xff]
  %v201 = vld [vmem:[#allocation2 + $0x1c8] sm:$0xff]
  %v202 = vld [vmem:[#allocation2 + $0x1d0] sm:$0xff]
  %v203 = vld [vmem:[#allocation2 + $0x1d8] sm:$0xff]
  %v204 = vld [vmem:[#allocation2 + $0x1e0] sm:$0xff]
  %v205 = vld [vmem:[#allocation2 + $0x1e8] sm:$0xff]
  %v206 = vld [vmem:[#allocation2 + $0x1f0] sm:$0xff]
  %v207 = vld [vmem:[#allocation2 + $0x1f8] sm:$0xff]
  %v208 = vld [vmem:[%s1] sm:$0xf]
  %v209 = vld [vmem:[%s1 + $0x4] sm:$0xf]
  %v210 = vld [vmem:[%s1 + $0x8] sm:$0xf]
  %v211 = vld [vmem:[%s1 + $0xc] sm:$0x3]
  %v276 = vunpack.c.l.b16 %v80
  %v277 = vunpack.c.l.b16 %v81
  %v278 = vunpack.c.l.b16 %v82
  %v279 = vunpack.c.l.b16 %v83
  %v280 = vunpack.c.l.b16 %v84
  %v281 = vunpack.c.l.b16 %v85
  %v282 = vunpack.c.l.b16 %v86
  %v283 = vunpack.c.l.b16 %v87
  %v284 = vunpack.c.l.b16 %v88
  %v285 = vunpack.c.l.b16 %v89
  %v286 = vunpack.c.l.b16 %v90
  %v287 = vunpack.c.l.b16 %v91
  %v288 = vunpack.c.l.b16 %v92
  %v289 = vunpack.c.l.b16 %v93
  %v290 = vunpack.c.l.b16 %v94
  %v291 = vunpack.c.l.b16 %v95
  %v292 = vunpack.c.l.b16 %v96
  %v293 = vunpack.c.l.b16 %v97
  %v294 = vunpack.c.l.b16 %v98
  %v295 = vunpack.c.l.b16 %v99
  %v296 = vunpack.c.l.b16 %v100
  %v297 = vunpack.c.l.b16 %v101
  %v298 = vunpack.c.l.b16 %v102
  %v299 = vunpack.c.l.b16 %v103
  %v300 = vunpack.c.l.b16 %v104
  %v301 = vunpack.c.l.b16 %v105
  %v302 = vunpack.c.l.b16 %v106
  %v303 = vunpack.c.l.b16 %v107
  %v304 = vunpack.c.l.b16 %v108
  %v305 = vunpack.c.l.b16 %v109
  %v306 = vunpack.c.l.b16 %v110
  %v307 = vunpack.c.l.b16 %v111
  %v308 = vunpack.c.l.b16 %v112
  %v309 = vunpack.c.l.b16 %v113
  %v310 = vunpack.c.l.b16 %v114
  %v311 = vunpack.c.l.b16 %v115
  %v312 = vunpack.c.l.b16 %v116
  %v313 = vunpack.c.l.b16 %v117
  %v314 = vunpack.c.l.b16 %v118
  %v315 = vunpack.c.l.b16 %v119
  %v316 = vunpack.c.l.b16 %v120
  %v317 = vunpack.c.l.b16 %v121
  %v318 = vunpack.c.l.b16 %v122
  %v319 = vunpack.c.l.b16 %v123
  %v320 = vunpack.c.l.b16 %v124
  %v321 = vunpack.c.l.b16 %v125
  %v322 = vunpack.c.l.b16 %v126
  %v323 = vunpack.c.l.b16 %v127
  %v324 = vunpack.c.l.b16 %v128
  %v325 = vunpack.c.l.b16 %v129
  %v326 = vunpack.c.l.b16 %v130
  %v327 = vunpack.c.l.b16 %v131
  %v328 = vunpack.c.l.b16 %v132
  %v329 = vunpack.c.l.b16 %v133
  %v330 = vunpack.c.l.b16 %v134
  %v331 = vunpack.c.l.b16 %v135
  %v332 = vunpack.c.l.b16 %v136
  %v333 = vunpack.c.l.b16 %v137
  %v334 = vunpack.c.l.b16 %v138
  %v335 = vunpack.c.l.b16 %v139
  %v336 = vunpack.c.l.b16 %v140
  %v337 = vunpack.c.l.b16 %v141
  %v338 = vunpack.c.l.b16 %v142
  %v339 = vunpack.c.l.b16 %v143
  %v340 = vpack.c.b16 %v277, %v276
  %v341 = vpack.c.b16 %v279, %v278
  %v342 = vpack.c.b16 %v281, %v280
  %v343 = vpack.c.b16 %v283, %v282
  %v344 = vpack.c.b16 %v285, %v284
  %v345 = vpack.c.b16 %v287, %v286
  %v346 = vpack.c.b16 %v289, %v288
  %v347 = vpack.c.b16 %v291, %v290
  %v348 = vpack.c.b16 %v293, %v292
  %v349 = vpack.c.b16 %v295, %v294
  %v350 = vpack.c.b16 %v297, %v296
  %v351 = vpack.c.b16 %v299, %v298
  %v352 = vpack.c.b16 %v301, %v300
  %v353 = vpack.c.b16 %v303, %v302
  %v354 = vpack.c.b16 %v305, %v304
  %v355 = vpack.c.b16 %v307, %v306
  %v356 = vpack.c.b16 %v309, %v308
  %v357 = vpack.c.b16 %v311, %v310
  %v358 = vpack.c.b16 %v313, %v312
  %v359 = vpack.c.b16 %v315, %v314
  %v360 = vpack.c.b16 %v317, %v316
  %v361 = vpack.c.b16 %v319, %v318
  %v362 = vpack.c.b16 %v321, %v320
  %v363 = vpack.c.b16 %v323, %v322
  %v364 = vpack.c.b16 %v325, %v324
  %v365 = vpack.c.b16 %v327, %v326
  %v366 = vpack.c.b16 %v329, %v328
  %v367 = vpack.c.b16 %v331, %v330
  %v368 = vpack.c.b16 %v333, %v332
  %v369 = vpack.c.b16 %v335, %v334
  %v370 = vpack.c.b16 %v337, %v336
  %v371 = vpack.c.b16 %v339, %v338
  %v376 = vunpack.c.l.b16 %v208
  %v377 = vunpack.c.l.b16 %v209
  %v378 = vunpack.c.l.b16 %v210
  %v379 = vunpack.c.l.b16 %v211
  %v380 = vpack.c.b16 %v377, %v376
  %v381 = vpack.c.b16 %v379, %v378
  %vm383 = vcmask 220160
  %v385 = vsel %vm383, %v340, 0
  %v388 = vsel %vm383, %v341, 0
  %v391 = vsel %vm383, %v342, 0
  %v394 = vsel %vm383, %v343, 0
  %v397 = vsel %vm383, %v344, 0
  %v400 = vsel %vm383, %v345, 0
  %v403 = vsel %vm383, %v346, 0
  %v406 = vsel %vm383, %v347, 0
  %v409 = vsel %vm383, %v348, 0
  %v412 = vsel %vm383, %v349, 0
  %v415 = vsel %vm383, %v350, 0
  %v418 = vsel %vm383, %v351, 0
  %v421 = vsel %vm383, %v352, 0
  %v424 = vsel %vm383, %v353, 0
  %v427 = vsel %vm383, %v354, 0
  %v430 = vsel %vm383, %v355, 0
  %v433 = vsel %vm383, %v356, 0
  %v436 = vsel %vm383, %v357, 0
  %v439 = vsel %vm383, %v358, 0
  %v442 = vsel %vm383, %v359, 0
  %v445 = vsel %vm383, %v360, 0
  %v448 = vsel %vm383, %v361, 0
  %v451 = vsel %vm383, %v362, 0
  %v454 = vsel %vm383, %v363, 0
  %v457 = vsel %vm383, %v364, 0
  %v460 = vsel %vm383, %v365, 0
  %v463 = vsel %vm383, %v366, 0
  %v466 = vsel %vm383, %v367, 0
  %v469 = vsel %vm383, %v368, 0
  %v472 = vsel %vm383, %v369, 0
  %v475 = vsel %vm383, %v370, 0
  %v478 = vsel %vm383, %v371, 0
  %vm480 = vcmask 1044480
  %vm481 = vcmask 1045504
  %v482 = vsel %vm480, 4294967295, 65535
  %v483 = vsel %vm481, %v482, 0
  %v485 = vand.u32 %v381, %v483
  %487 = vmatprep.subr.bf16.mxu0 0
  %488 = vmatpush1.bf16.msra.mxu0 0
  %489 = vmatprep.subr.bf16.mxu0 0
  %490 = vmatpush1.bf16.msra.mxu0 0
  %491 = vmatprep.subr.bf16.mxu0 0
  %492 = vmatpush1.bf16.msra.mxu0 0
  %493 = vmatprep.subr.bf16.mxu0 0
  %494 = vmatpush1.bf16.msra.mxu0 0
  %495 = vmatprep.subr.bf16.mxu0 0
  %496 = vmatpush1.bf16.msra.mxu0 0
  %497 = vmatprep.subr.bf16.mxu0 0
  %498 = vmatpush1.bf16.msra.mxu0 0
  %499 = vmatprep.subr.bf16.mxu0 0
  %500 = vmatpush1.bf16.msra.mxu0 %v485
  %501 = vmatprep.subr.bf16.mxu0 0
  %502 = vmatpush1.bf16.msra.mxu0 %v380
  %503 = vmatprep.subr.bf16.mxu0 0
  %504 = vmatpush2.bf16.msra.mxu0 0
  %505 = vmatprep.subr.bf16.mxu0 0
  %506 = vmatpush2.bf16.msra.mxu0 0
  %507 = vmatprep.subr.bf16.mxu0 0
  %508 = vmatpush2.bf16.msra.mxu0 0
  %509 = vmatprep.subr.bf16.mxu0 0
  %510 = vmatpush2.bf16.msra.mxu0 0
  %511 = vmatprep.subr.bf16.mxu0 0
  %512 = vmatpush2.bf16.msra.mxu0 0
  %513 = vmatprep.subr.bf16.mxu0 0
  %514 = vmatpush2.bf16.msra.mxu0 0
  %515 = vmatprep.subr.bf16.mxu0 0
  %516 = vmatpush2.bf16.msra.mxu0 0
  %517 = vmatprep.subr.bf16.mxu0 0
  %518 = vmatpush2.bf16.msra.mxu0 0
  %519 = vmatprep.mubr.bf16.mxu0 0
  %520 = vmatmul.mubr.bf16.gmra.mxu0 %v385
  %v521 = vpop.f32.mrf.mxu0
  %v522 = vadd.f32 0.0, %v521
  %v523 = vpop.f32.mrf.mxu0
  %v524 = vpop.f32.mrf.mxu0
  %v525 = vadd.f32 0.0, %v524
  %v526 = vpop.f32.mrf.mxu0
  %527 = vmatprep.mubr.bf16.mxu0 0
  %528 = vmatmul.mubr.bf16.gmra.mxu0 %v388
  %v529 = vpop.f32.mrf.mxu0
  %v530 = vadd.f32 0.0, %v529
  %v531 = vpop.f32.mrf.mxu0
  %v532 = vpop.f32.mrf.mxu0
  %v533 = vadd.f32 0.0, %v532
  %v534 = vpop.f32.mrf.mxu0
  %535 = vmatprep.mubr.bf16.mxu0 0
  %536 = vmatmul.mubr.bf16.gmra.mxu0 %v391
  %v537 = vpop.f32.mrf.mxu0
  %v538 = vadd.f32 0.0, %v537
  %v539 = vpop.f32.mrf.mxu0
  %v540 = vpop.f32.mrf.mxu0
  %v541 = vadd.f32 0.0, %v540
  %v542 = vpop.f32.mrf.mxu0
  %543 = vmatprep.mubr.bf16.mxu0 0
  %544 = vmatmul.mubr.bf16.gmra.mxu0 %v394
  %v545 = vpop.f32.mrf.mxu0
  %v546 = vadd.f32 0.0, %v545
  %v547 = vpop.f32.mrf.mxu0
  %v548 = vpop.f32.mrf.mxu0
  %v549 = vadd.f32 0.0, %v548
  %v550 = vpop.f32.mrf.mxu0
  %551 = vmatprep.mubr.bf16.mxu0 0
  %552 = vmatmul.mubr.bf16.gmra.mxu0 %v397
  %v553 = vpop.f32.mrf.mxu0
  %v554 = vadd.f32 0.0, %v553
  %v555 = vpop.f32.mrf.mxu0
  %v556 = vpop.f32.mrf.mxu0
  %v557 = vadd.f32 0.0, %v556
  %v558 = vpop.f32.mrf.mxu0
  %559 = vmatprep.mubr.bf16.mxu0 0
  %560 = vmatmul.mubr.bf16.gmra.mxu0 %v400
  %v561 = vpop.f32.mrf.mxu0
  %v562 = vadd.f32 0.0, %v561
  %v563 = vpop.f32.mrf.mxu0
  %v564 = vpop.f32.mrf.mxu0
  %v565 = vadd.f32 0.0, %v564
  %v566 = vpop.f32.mrf.mxu0
  %567 = vmatprep.mubr.bf16.mxu0 0
  %568 = vmatmul.mubr.bf16.gmra.mxu0 %v403
  %v569 = vpop.f32.mrf.mxu0
  %v570 = vadd.f32 0.0, %v569
  %v571 = vpop.f32.mrf.mxu0
  %v572 = vpop.f32.mrf.mxu0
  %v573 = vadd.f32 0.0, %v572
  %v574 = vpop.f32.mrf.mxu0
  %575 = vmatprep.mubr.bf16.mxu0 0
  %576 = vmatmul.mubr.bf16.gmra.mxu0 %v406
  %v577 = vpop.f32.mrf.mxu0
  %v578 = vadd.f32 0.0, %v577
  %v579 = vpop.f32.mrf.mxu0
  %v580 = vpop.f32.mrf.mxu0
  %v581 = vadd.f32 0.0, %v580
  %v582 = vpop.f32.mrf.mxu0
  %583 = vmatprep.mubr.bf16.mxu0 0
  %584 = vmatmul.mubr.bf16.gmra.mxu0 %v409
  %v585 = vpop.f32.mrf.mxu0
  %v586 = vadd.f32 0.0, %v585
  %v587 = vpop.f32.mrf.mxu0
  %v588 = vpop.f32.mrf.mxu0
  %v589 = vadd.f32 0.0, %v588
  %v590 = vpop.f32.mrf.mxu0
  %591 = vmatprep.mubr.bf16.mxu0 0
  %592 = vmatmul.mubr.bf16.gmra.mxu0 %v412
  %v593 = vpop.f32.mrf.mxu0
  %v594 = vadd.f32 0.0, %v593
  %v595 = vpop.f32.mrf.mxu0
  %v596 = vpop.f32.mrf.mxu0
  %v597 = vadd.f32 0.0, %v596
  %v598 = vpop.f32.mrf.mxu0
  %599 = vmatprep.mubr.bf16.mxu0 0
  %600 = vmatmul.mubr.bf16.gmra.mxu0 %v415
  %v601 = vpop.f32.mrf.mxu0
  %v602 = vadd.f32 0.0, %v601
  %v603 = vpop.f32.mrf.mxu0
  %v604 = vpop.f32.mrf.mxu0
  %v605 = vadd.f32 0.0, %v604
  %v606 = vpop.f32.mrf.mxu0
  %607 = vmatprep.mubr.bf16.mxu0 0
  %608 = vmatmul.mubr.bf16.gmra.mxu0 %v418
  %v609 = vpop.f32.mrf.mxu0
  %v610 = vadd.f32 0.0, %v609
  %v611 = vpop.f32.mrf.mxu0
  %v612 = vpop.f32.mrf.mxu0
  %v613 = vadd.f32 0.0, %v612
  %v614 = vpop.f32.mrf.mxu0
  %615 = vmatprep.mubr.bf16.mxu0 0
  %616 = vmatmul.mubr.bf16.gmra.mxu0 %v421
  %v617 = vpop.f32.mrf.mxu0
  %v618 = vadd.f32 0.0, %v617
  %v619 = vpop.f32.mrf.mxu0
  %v620 = vpop.f32.mrf.mxu0
  %v621 = vadd.f32 0.0, %v620
  %v622 = vpop.f32.mrf.mxu0
  %623 = vmatprep.mubr.bf16.mxu0 0
  %624 = vmatmul.mubr.bf16.gmra.mxu0 %v424
  %v625 = vpop.f32.mrf.mxu0
  %v626 = vadd.f32 0.0, %v625
  %v627 = vpop.f32.mrf.mxu0
  %v628 = vpop.f32.mrf.mxu0
  %v629 = vadd.f32 0.0, %v628
  %v630 = vpop.f32.mrf.mxu0
  %631 = vmatprep.mubr.bf16.mxu0 0
  %632 = vmatmul.mubr.bf16.gmra.mxu0 %v427
  %v633 = vpop.f32.mrf.mxu0
  %v634 = vadd.f32 0.0, %v633
  %v635 = vpop.f32.mrf.mxu0
  %v636 = vpop.f32.mrf.mxu0
  %v637 = vadd.f32 0.0, %v636
  %v638 = vpop.f32.mrf.mxu0
  %639 = vmatprep.mubr.bf16.mxu0 0
  %640 = vmatmul.mubr.bf16.gmra.mxu0 %v430
  %v641 = vpop.f32.mrf.mxu0
  %v642 = vadd.f32 0.0, %v641
  %v643 = vpop.f32.mrf.mxu0
  %v644 = vpop.f32.mrf.mxu0
  %v645 = vadd.f32 0.0, %v644
  %v646 = vpop.f32.mrf.mxu0
  %647 = vmatprep.mubr.bf16.mxu0 0
  %648 = vmatmul.mubr.bf16.gmra.mxu0 %v433
  %v649 = vpop.f32.mrf.mxu0
  %v650 = vadd.f32 0.0, %v649
  %v651 = vpop.f32.mrf.mxu0
  %v652 = vpop.f32.mrf.mxu0
  %v653 = vadd.f32 0.0, %v652
  %v654 = vpop.f32.mrf.mxu0
  %655 = vmatprep.mubr.bf16.mxu0 0
  %656 = vmatmul.mubr.bf16.gmra.mxu0 %v436
  %v657 = vpop.f32.mrf.mxu0
  %v658 = vadd.f32 0.0, %v657
  %v659 = vpop.f32.mrf.mxu0
  %v660 = vpop.f32.mrf.mxu0
  %v661 = vadd.f32 0.0, %v660
  %v662 = vpop.f32.mrf.mxu0
  %663 = vmatprep.mubr.bf16.mxu0 0
  %664 = vmatmul.mubr.bf16.gmra.mxu0 %v439
  %v665 = vpop.f32.mrf.mxu0
  %v666 = vadd.f32 0.0, %v665
  %v667 = vpop.f32.mrf.mxu0
  %v668 = vpop.f32.mrf.mxu0
  %v669 = vadd.f32 0.0, %v668
  %v670 = vpop.f32.mrf.mxu0
  %671 = vmatprep.mubr.bf16.mxu0 0
  %672 = vmatmul.mubr.bf16.gmra.mxu0 %v442
  %v673 = vpop.f32.mrf.mxu0
  %v674 = vadd.f32 0.0, %v673
  %v675 = vpop.f32.mrf.mxu0
  %v676 = vpop.f32.mrf.mxu0
  %v677 = vadd.f32 0.0, %v676
  %v678 = vpop.f32.mrf.mxu0
  %679 = vmatprep.mubr.bf16.mxu0 0
  %680 = vmatmul.mubr.bf16.gmra.mxu0 %v445
  %v681 = vpop.f32.mrf.mxu0
  %v682 = vadd.f32 0.0, %v681
  %v683 = vpop.f32.mrf.mxu0
  %v684 = vpop.f32.mrf.mxu0
  %v685 = vadd.f32 0.0, %v684
  %v686 = vpop.f32.mrf.mxu0
  %687 = vmatprep.mubr.bf16.mxu0 0
  %688 = vmatmul.mubr.bf16.gmra.mxu0 %v448
  %v689 = vpop.f32.mrf.mxu0
  %v690 = vadd.f32 0.0, %v689
  %v691 = vpop.f32.mrf.mxu0
  %v692 = vpop.f32.mrf.mxu0
  %v693 = vadd.f32 0.0, %v692
  %v694 = vpop.f32.mrf.mxu0
  %695 = vmatprep.mubr.bf16.mxu0 0
  %696 = vmatmul.mubr.bf16.gmra.mxu0 %v451
  %v697 = vpop.f32.mrf.mxu0
  %v698 = vadd.f32 0.0, %v697
  %v699 = vpop.f32.mrf.mxu0
  %v700 = vpop.f32.mrf.mxu0
  %v701 = vadd.f32 0.0, %v700
  %v702 = vpop.f32.mrf.mxu0
  %703 = vmatprep.mubr.bf16.mxu0 0
  %704 = vmatmul.mubr.bf16.gmra.mxu0 %v454
  %v705 = vpop.f32.mrf.mxu0
  %v706 = vadd.f32 0.0, %v705
  %v707 = vpop.f32.mrf.mxu0
  %v708 = vpop.f32.mrf.mxu0
  %v709 = vadd.f32 0.0, %v708
  %v710 = vpop.f32.mrf.mxu0
  %711 = vmatprep.mubr.bf16.mxu0 0
  %712 = vmatmul.mubr.bf16.gmra.mxu0 %v457
  %v713 = vpop.f32.mrf.mxu0
  %v714 = vadd.f32 0.0, %v713
  %v715 = vpop.f32.mrf.mxu0
  %v716 = vpop.f32.mrf.mxu0
  %v717 = vadd.f32 0.0, %v716
  %v718 = vpop.f32.mrf.mxu0
  %719 = vmatprep.mubr.bf16.mxu0 0
  %720 = vmatmul.mubr.bf16.gmra.mxu0 %v460
  %v721 = vpop.f32.mrf.mxu0
  %v722 = vadd.f32 0.0, %v721
  %v723 = vpop.f32.mrf.mxu0
  %v724 = vpop.f32.mrf.mxu0
  %v725 = vadd.f32 0.0, %v724
  %v726 = vpop.f32.mrf.mxu0
  %727 = vmatprep.mubr.bf16.mxu0 0
  %728 = vmatmul.mubr.bf16.gmra.mxu0 %v463
  %v729 = vpop.f32.mrf.mxu0
  %v730 = vadd.f32 0.0, %v729
  %v731 = vpop.f32.mrf.mxu0
  %v732 = vpop.f32.mrf.mxu0
  %v733 = vadd.f32 0.0, %v732
  %v734 = vpop.f32.mrf.mxu0
  %735 = vmatprep.mubr.bf16.mxu0 0
  %736 = vmatmul.mubr.bf16.gmra.mxu0 %v466
  %v737 = vpop.f32.mrf.mxu0
  %v738 = vadd.f32 0.0, %v737
  %v739 = vpop.f32.mrf.mxu0
  %v740 = vpop.f32.mrf.mxu0
  %v741 = vadd.f32 0.0, %v740
  %v742 = vpop.f32.mrf.mxu0
  %743 = vmatprep.mubr.bf16.mxu0 0
  %744 = vmatmul.mubr.bf16.gmra.mxu0 %v469
  %v745 = vpop.f32.mrf.mxu0
  %v746 = vadd.f32 0.0, %v745
  %v747 = vpop.f32.mrf.mxu0
  %v748 = vpop.f32.mrf.mxu0
  %v749 = vadd.f32 0.0, %v748
  %v750 = vpop.f32.mrf.mxu0
  %751 = vmatprep.mubr.bf16.mxu0 0
  %752 = vmatmul.mubr.bf16.gmra.mxu0 %v472
  %v753 = vpop.f32.mrf.mxu0
  %v754 = vadd.f32 0.0, %v753
  %v755 = vpop.f32.mrf.mxu0
  %v756 = vpop.f32.mrf.mxu0
  %v757 = vadd.f32 0.0, %v756
  %v758 = vpop.f32.mrf.mxu0
  %759 = vmatprep.mubr.bf16.mxu0 0
  %760 = vmatmul.mubr.bf16.gmra.mxu0 %v475
  %v761 = vpop.f32.mrf.mxu0
  %v762 = vadd.f32 0.0, %v761
  %v763 = vpop.f32.mrf.mxu0
  %v764 = vpop.f32.mrf.mxu0
  %v765 = vadd.f32 0.0, %v764
  %v766 = vpop.f32.mrf.mxu0
  %767 = vmatprep.mubr.bf16.mxu0 0
  %768 = vmatmul.mubr.bf16.gmra.mxu0 %v478
  %v769 = vpop.f32.mrf.mxu0
  %v770 = vadd.f32 0.0, %v769
  %v771 = vpop.f32.mrf.mxu0
  %v772 = vpop.f32.mrf.mxu0
  %v773 = vadd.f32 0.0, %v772
  %v774 = vpop.f32.mrf.mxu0
  %775 = vdwg.mxu0
  %v776 = vadd.f32 %v144, %v522
  %v777 = vadd.f32 %v145, %v525
  %v778 = vadd.f32 %v146, %v530
  %v779 = vadd.f32 %v147, %v533
  %v780 = vadd.f32 %v148, %v538
  %v781 = vadd.f32 %v149, %v541
  %v782 = vadd.f32 %v150, %v546
  %v783 = vadd.f32 %v151, %v549
  %v784 = vadd.f32 %v152, %v554
  %v785 = vadd.f32 %v153, %v557
  %v786 = vadd.f32 %v154, %v562
  %v787 = vadd.f32 %v155, %v565
  %v788 = vadd.f32 %v156, %v570
  %v789 = vadd.f32 %v157, %v573
  %v790 = vadd.f32 %v158, %v578
  %v791 = vadd.f32 %v159, %v581
  %v792 = vadd.f32 %v160, %v586
  %v793 = vadd.f32 %v161, %v589
  %v794 = vadd.f32 %v162, %v594
  %v795 = vadd.f32 %v163, %v597
  %v796 = vadd.f32 %v164, %v602
  %v797 = vadd.f32 %v165, %v605
  %v798 = vadd.f32 %v166, %v610
  %v799 = vadd.f32 %v167, %v613
  %v800 = vadd.f32 %v168, %v618
  %v801 = vadd.f32 %v169, %v621
  %v802 = vadd.f32 %v170, %v626
  %v803 = vadd.f32 %v171, %v629
  %v804 = vadd.f32 %v172, %v634
  %v805 = vadd.f32 %v173, %v637
  %v806 = vadd.f32 %v174, %v642
  %v807 = vadd.f32 %v175, %v645
  %v808 = vadd.f32 %v176, %v650
  %v809 = vadd.f32 %v177, %v653
  %v810 = vadd.f32 %v178, %v658
  %v811 = vadd.f32 %v179, %v661
  %v812 = vadd.f32 %v180, %v666
  %v813 = vadd.f32 %v181, %v669
  %v814 = vadd.f32 %v182, %v674
  %v815 = vadd.f32 %v183, %v677
  %v816 = vadd.f32 %v184, %v682
  %v817 = vadd.f32 %v185, %v685
  %v818 = vadd.f32 %v186, %v690
  %v819 = vadd.f32 %v187, %v693
  %v820 = vadd.f32 %v188, %v698
  %v821 = vadd.f32 %v189, %v701
  %v822 = vadd.f32 %v190, %v706
  %v823 = vadd.f32 %v191, %v709
  %v824 = vadd.f32 %v192, %v714
  %v825 = vadd.f32 %v193, %v717
  %v826 = vadd.f32 %v194, %v722
  %v827 = vadd.f32 %v195, %v725
  %v828 = vadd.f32 %v196, %v730
  %v829 = vadd.f32 %v197, %v733
  %v830 = vadd.f32 %v198, %v738
  %v831 = vadd.f32 %v199, %v741
  %v832 = vadd.f32 %v200, %v746
  %v833 = vadd.f32 %v201, %v749
  %v834 = vadd.f32 %v202, %v754
  %v835 = vadd.f32 %v203, %v757
  %v836 = vadd.f32 %v204, %v762
  %v837 = vadd.f32 %v205, %v765
  %v838 = vadd.f32 %v206, %v770
  %v839 = vadd.f32 %v207, %v773
  %840 = vst [vmem:[#allocation2] sm:$0xff] %v776
  %841 = vst [vmem:[#allocation2 + $0x8] sm:$0xff] %v777
  %842 = vst [vmem:[#allocation2 + $0x10] sm:$0xff] %v778
  %843 = vst [vmem:[#allocation2 + $0x18] sm:$0xff] %v779
  %844 = vst [vmem:[#allocation2 + $0x20] sm:$0xff] %v780
  %845 = vst [vmem:[#allocation2 + $0x28] sm:$0xff] %v781
  %846 = vst [vmem:[#allocation2 + $0x30] sm:$0xff] %v782
  %847 = vst [vmem:[#allocation2 + $0x38] sm:$0xff] %v783
  %848 = vst [vmem:[#allocation2 + $0x40] sm:$0xff] %v784
  %849 = vst [vmem:[#allocation2 + $0x48] sm:$0xff] %v785
  %850 = vst [vmem:[#allocation2 + $0x50] sm:$0xff] %v786
  %851 = vst [vmem:[#allocation2 + $0x58] sm:$0xff] %v787
  %852 = vst [vmem:[#allocation2 + $0x60] sm:$0xff] %v788
  %853 = vst [vmem:[#allocation2 + $0x68] sm:$0xff] %v789
  %854 = vst [vmem:[#allocation2 + $0x70] sm:$0xff] %v790
  %855 = vst [vmem:[#allocation2 + $0x78] sm:$0xff] %v791
  %856 = vst [vmem:[#allocation2 + $0x80] sm:$0xff] %v792
  %857 = vst [vmem:[#allocation2 + $0x88] sm:$0xff] %v793
  %858 = vst [vmem:[#allocation2 + $0x90] sm:$0xff] %v794
  %859 = vst [vmem:[#allocation2 + $0x98] sm:$0xff] %v795
  %860 = vst [vmem:[#allocation2 + $0xa0] sm:$0xff] %v796
  %861 = vst [vmem:[#allocation2 + $0xa8] sm:$0xff] %v797
  %862 = vst [vmem:[#allocation2 + $0xb0] sm:$0xff] %v798
  %863 = vst [vmem:[#allocation2 + $0xb8] sm:$0xff] %v799
  %864 = vst [vmem:[#allocation2 + $0xc0] sm:$0xff] %v800
  %865 = vst [vmem:[#allocation2 + $0xc8] sm:$0xff] %v801
  %866 = vst [vmem:[#allocation2 + $0xd0] sm:$0xff] %v802
  %867 = vst [vmem:[#allocation2 + $0xd8] sm:$0xff] %v803
  %868 = vst [vmem:[#allocation2 + $0xe0] sm:$0xff] %v804
  %869 = vst [vmem:[#allocation2 + $0xe8] sm:$0xff] %v805
  %870 = vst [vmem:[#allocation2 + $0xf0] sm:$0xff] %v806
  %871 = vst [vmem:[#allocation2 + $0xf8] sm:$0xff] %v807
  %872 = vst [vmem:[#allocation2 + $0x100] sm:$0xff] %v808
  %873 = vst [vmem:[#allocation2 + $0x108] sm:$0xff] %v809
  %874 = vst [vmem:[#allocation2 + $0x110] sm:$0xff] %v810
  %875 = vst [vmem:[#allocation2 + $0x118] sm:$0xff] %v811
  %876 = vst [vmem:[#allocation2 + $0x120] sm:$0xff] %v812
  %877 = vst [vmem:[#allocation2 + $0x128] sm:$0xff] %v813
  %878 = vst [vmem:[#allocation2 + $0x130] sm:$0xff] %v814
  %879 = vst [vmem:[#allocation2 + $0x138] sm:$0xff] %v815
  %880 = vst [vmem:[#allocation2 + $0x140] sm:$0xff] %v816
  %881 = vst [vmem:[#allocation2 + $0x148] sm:$0xff] %v817
  %882 = vst [vmem:[#allocation2 + $0x150] sm:$0xff] %v818
  %883 = vst [vmem:[#allocation2 + $0x158] sm:$0xff] %v819
  %884 = vst [vmem:[#allocation2 + $0x160] sm:$0xff] %v820
  %885 = vst [vmem:[#allocation2 + $0x168] sm:$0xff] %v821
  %886 = vst [vmem:[#allocation2 + $0x170] sm:$0xff] %v822
  %887 = vst [vmem:[#allocation2 + $0x178] sm:$0xff] %v823
  %888 = vst [vmem:[#allocation2 + $0x180] sm:$0xff] %v824
  %889 = vst [vmem:[#allocation2 + $0x188] sm:$0xff] %v825
  %890 = vst [vmem:[#allocation2 + $0x190] sm:$0xff] %v826
  %891 = vst [vmem:[#allocation2 + $0x198] sm:$0xff] %v827
  %892 = vst [vmem:[#allocation2 + $0x1a0] sm:$0xff] %v828
  %893 = vst [vmem:[#allocation2 + $0x1a8] sm:$0xff] %v829
  %894 = vst [vmem:[#allocation2 + $0x1b0] sm:$0xff] %v830
  %895 = vst [vmem:[#allocation2 + $0x1b8] sm:$0xff] %v831
  %896 = vst [vmem:[#allocation2 + $0x1c0] sm:$0xff] %v832
  %897 = vst [vmem:[#allocation2 + $0x1c8] sm:$0xff] %v833
  %898 = vst [vmem:[#allocation2 + $0x1d0] sm:$0xff] %v834
  %899 = vst [vmem:[#allocation2 + $0x1d8] sm:$0xff] %v835
  %900 = vst [vmem:[#allocation2 + $0x1e0] sm:$0xff] %v836
  %901 = vst [vmem:[#allocation2 + $0x1e8] sm:$0xff] %v837
  %902 = vst [vmem:[#allocation2 + $0x1f0] sm:$0xff] %v838
  %903 = vst [vmem:[#allocation2 + $0x1f8] sm:$0xff] %v839
  // Predicated region
  $region14: #{fused_matmul.1} parent=0 // pred_check
    %p904 = pneg %p12
  $region15: #{fused_matmul.1} parent=0 // pred_check_branch
    %906 = sbr.rel (%p904) target = $region17
  $region16: #{fused_matmul.1} parent=0 // pred_region
    %v907 = vld [vmem:[#allocation2] sm:$0xff]
    %v908 = vld [vmem:[#allocation2 + $0x8] sm:$0xff]
    %v909 = vld [vmem:[#allocation2 + $0x10] sm:$0xff]
    %v910 = vld [vmem:[#allocation2 + $0x18] sm:$0xff]
    %v911 = vld [vmem:[#allocation2 + $0x20] sm:$0xff]
    %v912 = vld [vmem:[#allocation2 + $0x28] sm:$0xff]
    %v913 = vld [vmem:[#allocation2 + $0x30] sm:$0xff]
    %v914 = vld [vmem:[#allocation2 + $0x38] sm:$0xff]
    %v915 = vld [vmem:[#allocation2 + $0x40] sm:$0xff]
    %v916 = vld [vmem:[#allocation2 + $0x48] sm:$0xff]
    %v917 = vld [vmem:[#allocation2 + $0x50] sm:$0xff]
    %v918 = vld [vmem:[#allocation2 + $0x58] sm:$0xff]
    %v919 = vld [vmem:[#allocation2 + $0x60] sm:$0xff]
    %v920 = vld [vmem:[#allocation2 + $0x68] sm:$0xff]
    %v921 = vld [vmem:[#allocation2 + $0x70] sm:$0xff]
    %v922 = vld [vmem:[#allocation2 + $0x78] sm:$0xff]
    %v923 = vld [vmem:[#allocation2 + $0x80] sm:$0xff]
    %v924 = vld [vmem:[#allocation2 + $0x88] sm:$0xff]
    %v925 = vld [vmem:[#allocation2 + $0x90] sm:$0xff]
    %v926 = vld [vmem:[#allocation2 + $0x98] sm:$0xff]
    %v927 = vld [vmem:[#allocation2 + $0xa0] sm:$0xff]
    %v928 = vld [vmem:[#allocation2 + $0xa8] sm:$0xff]
    %v929 = vld [vmem:[#allocation2 + $0xb0] sm:$0xff]
    %v930 = vld [vmem:[#allocation2 + $0xb8] sm:$0xff]
    %v931 = vld [vmem:[#allocation2 + $0xc0] sm:$0xff]
    %v932 = vld [vmem:[#allocation2 + $0xc8] sm:$0xff]
    %v933 = vld [vmem:[#allocation2 + $0xd0] sm:$0xff]
    %v934 = vld [vmem:[#allocation2 + $0xd8] sm:$0xff]
    %v935 = vld [vmem:[#allocation2 + $0xe0] sm:$0xff]
    %v936 = vld [vmem:[#allocation2 + $0xe8] sm:$0xff]
    %v937 = vld [vmem:[#allocation2 + $0xf0] sm:$0xff]
    %v938 = vld [vmem:[#allocation2 + $0xf8] sm:$0xff]
    %v939 = vld [vmem:[#allocation2 + $0x100] sm:$0xff]
    %v940 = vld [vmem:[#allocation2 + $0x108] sm:$0xff]
    %v941 = vld [vmem:[#allocation2 + $0x110] sm:$0xff]
    %v942 = vld [vmem:[#allocation2 + $0x118] sm:$0xff]
    %v943 = vld [vmem:[#allocation2 + $0x120] sm:$0xff]
    %v944 = vld [vmem:[#allocation2 + $0x128] sm:$0xff]
    %v945 = vld [vmem:[#allocation2 + $0x130] sm:$0xff]
    %v946 = vld [vmem:[#allocation2 + $0x138] sm:$0xff]
    %v947 = vld [vmem:[#allocation2 + $0x140] sm:$0xff]
    %v948 = vld [vmem:[#allocation2 + $0x148] sm:$0xff]
    %v949 = vld [vmem:[#allocation2 + $0x150] sm:$0xff]
    %v950 = vld [vmem:[#allocation2 + $0x158] sm:$0xff]
    %v951 = vld [vmem:[#allocation2 + $0x160] sm:$0xff]
    %v952 = vld [vmem:[#allocation2 + $0x168] sm:$0xff]
    %v953 = vld [vmem:[#allocation2 + $0x170] sm:$0xff]
    %v954 = vld [vmem:[#allocation2 + $0x178] sm:$0xff]
    %v955 = vld [vmem:[#allocation2 + $0x180] sm:$0xff]
    %v956 = vld [vmem:[#allocation2 + $0x188] sm:$0xff]
    %v957 = vld [vmem:[#allocation2 + $0x190] sm:$0xff]
    %v958 = vld [vmem:[#allocation2 + $0x198] sm:$0xff]
    %v959 = vld [vmem:[#allocation2 + $0x1a0] sm:$0xff]
    %v960 = vld [vmem:[#allocation2 + $0x1a8] sm:$0xff]
    %v961 = vld [vmem:[#allocation2 + $0x1b0] sm:$0xff]
    %v962 = vld [vmem:[#allocation2 + $0x1b8] sm:$0xff]
    %v963 = vld [vmem:[#allocation2 + $0x1c0] sm:$0xff]
    %v964 = vld [vmem:[#allocation2 + $0x1c8] sm:$0xff]
    %v965 = vld [vmem:[#allocation2 + $0x1d0] sm:$0xff]
    %v966 = vld [vmem:[#allocation2 + $0x1d8] sm:$0xff]
    %v967 = vld [vmem:[#allocation2 + $0x1e0] sm:$0xff]
    %v968 = vld [vmem:[#allocation2 + $0x1e8] sm:$0xff]
    %v969 = vld [vmem:[#allocation2 + $0x1f0] sm:$0xff]
    %v970 = vld [vmem:[#allocation2 + $0x1f8] sm:$0xff]
    %v971 = vadd.f32 %v907, %v908
    %v972 = vadd.f32 %v971, %v909
    %v973 = vadd.f32 %v972, %v910
    %v974 = vadd.f32 %v973, %v911
    %v975 = vadd.f32 %v974, %v912
    %v976 = vadd.f32 %v975, %v913
    %v977 = vadd.f32 %v976, %v914
    %v978 = vadd.f32 %v977, %v915
    %v979 = vadd.f32 %v978, %v916
    %v980 = vadd.f32 %v979, %v917
    %v981 = vadd.f32 %v980, %v918
    %v982 = vadd.f32 %v981, %v919
    %v983 = vadd.f32 %v982, %v920
    %v984 = vadd.f32 %v983, %v921
    %v985 = vadd.f32 %v984, %v922
    %v986 = vadd.f32 %v985, %v923
    %v987 = vadd.f32 %v986, %v924
    %v988 = vadd.f32 %v987, %v925
    %v989 = vadd.f32 %v988, %v926
    %v990 = vadd.f32 %v989, %v927
    %v991 = vadd.f32 %v990, %v928
    %v992 = vadd.f32 %v991, %v929
    %v993 = vadd.f32 %v992, %v930
    %v994 = vadd.f32 %v993, %v931
    %v995 = vadd.f32 %v994, %v932
    %v996 = vadd.f32 %v995, %v933
    %v997 = vadd.f32 %v996, %v934
    %v998 = vadd.f32 %v997, %v935
    %v999 = vadd.f32 %v998, %v936
    %v1000 = vadd.f32 %v999, %v937
    %v1001 = vadd.f32 %v1000, %v938
    %v1002 = vadd.f32 %v1001, %v939
    %v1003 = vadd.f32 %v1002, %v940
    %v1004 = vadd.f32 %v1003, %v941
    %v1005 = vadd.f32 %v1004, %v942
    %v1006 = vadd.f32 %v1005, %v943
    %v1007 = vadd.f32 %v1006, %v944
    %v1008 = vadd.f32 %v1007, %v945
    %v1009 = vadd.f32 %v1008, %v946
    %v1010 = vadd.f32 %v1009, %v947
    %v1011 = vadd.f32 %v1010, %v948
    %v1012 = vadd.f32 %v1011, %v949
    %v1013 = vadd.f32 %v1012, %v950
    %v1014 = vadd.f32 %v1013, %v951
    %v1015 = vadd.f32 %v1014, %v952
    %v1016 = vadd.f32 %v1015, %v953
    %v1017 = vadd.f32 %v1016, %v954
    %v1018 = vadd.f32 %v1017, %v955
    %v1019 = vadd.f32 %v1018, %v956
    %v1020 = vadd.f32 %v1019, %v957
    %v1021 = vadd.f32 %v1020, %v958
    %v1022 = vadd.f32 %v1021, %v959
    %v1023 = vadd.f32 %v1022, %v960
    %v1024 = vadd.f32 %v1023, %v961
    %v1025 = vadd.f32 %v1024, %v962
    %v1026 = vadd.f32 %v1025, %v963
    %v1027 = vadd.f32 %v1026, %v964
    %v1028 = vadd.f32 %v1027, %v965
    %v1029 = vadd.f32 %v1028, %v966
    %v1030 = vadd.f32 %v1029, %v967
    %v1031 = vadd.f32 %v1030, %v968
    %v1032 = vadd.f32 %v1031, %v969
    %v1033 = vadd.f32 %v1032, %v970
    %v1034 = vrot.slane %v1033, 4
    %v1035 = vadd.f32 %v1033, %v1034
    %v1036 = vrot.slane %v1035, 2
    %v1037 = vadd.f32 %v1035, %v1036
    %v1038 = vrot.slane %v1037, 1
    %v1039 = vadd.f32 %v1037, %v1038
    %v1040 = vrcp.pop 512.0
    %v1041 = vmul.f32 %v1039, %v1040
    %v1042 = vsub.f32 %v907, %v1041
    %v1043 = vsub.f32 %v908, %v1041
    %v1044 = vsub.f32 %v909, %v1041
    %v1045 = vsub.f32 %v910, %v1041
    %v1046 = vsub.f32 %v911, %v1041
    %v1047 = vsub.f32 %v912, %v1041
    %v1048 = vsub.f32 %v913, %v1041
    %v1049 = vsub.f32 %v914, %v1041
    %v1050 = vsub.f32 %v915, %v1041
    %v1051 = vsub.f32 %v916, %v1041
    %v1052 = vsub.f32 %v917, %v1041
    %v1053 = vsub.f32 %v918, %v1041
    %v1054 = vsub.f32 %v919, %v1041
    %v1055 = vsub.f32 %v920, %v1041
    %v1056 = vsub.f32 %v921, %v1041
    %v1057 = vsub.f32 %v922, %v1041
    %v1058 = vsub.f32 %v923, %v1041
    %v1059 = vsub.f32 %v924, %v1041
    %v1060 = vsub.f32 %v925, %v1041
    %v1061 = vsub.f32 %v926, %v1041
    %v1062 = vsub.f32 %v927, %v1041
    %v1063 = vsub.f32 %v928, %v1041
    %v1064 = vsub.f32 %v929, %v1041
    %v1065 = vsub.f32 %v930, %v1041
    %v1066 = vsub.f32 %v931, %v1041
    %v1067 = vsub.f32 %v932, %v1041
    %v1068 = vsub.f32 %v933, %v1041
    %v1069 = vsub.f32 %v934, %v1041
    %v1070 = vsub.f32 %v935, %v1041
    %v1071 = vsub.f32 %v936, %v1041
    %v1072 = vsub.f32 %v937, %v1041
    %v1073 = vsub.f32 %v938, %v1041
    %v1074 = vsub.f32 %v939, %v1041
    %v1075 = vsub.f32 %v940, %v1041
    %v1076 = vsub.f32 %v941, %v1041
    %v1077 = vsub.f32 %v942, %v1041
    %v1078 = vsub.f32 %v943, %v1041
    %v1079 = vsub.f32 %v944, %v1041
    %v1080 = vsub.f32 %v945, %v1041
    %v1081 = vsub.f32 %v946, %v1041
    %v1082 = vsub.f32 %v947, %v1041
    %v1083 = vsub.f32 %v948, %v1041
    %v1084 = vsub.f32 %v949, %v1041
    %v1085 = vsub.f32 %v950, %v1041
    %v1086 = vsub.f32 %v951, %v1041
    %v1087 = vsub.f32 %v952, %v1041
    %v1088 = vsub.f32 %v953, %v1041
    %v1089 = vsub.f32 %v954, %v1041
    %v1090 = vsub.f32 %v955, %v1041
    %v1091 = vsub.f32 %v956, %v1041
    %v1092 = vsub.f32 %v957, %v1041
    %v1093 = vsub.f32 %v958, %v1041
    %v1094 = vsub.f32 %v959, %v1041
    %v1095 = vsub.f32 %v960, %v1041
    %v1096 = vsub.f32 %v961, %v1041
    %v1097 = vsub.f32 %v962, %v1041
    %v1098 = vsub.f32 %v963, %v1041
    %v1099 = vsub.f32 %v964, %v1041
    %v1100 = vsub.f32 %v965, %v1041
    %v1101 = vsub.f32 %v966, %v1041
    %v1102 = vsub.f32 %v967, %v1041
    %v1103 = vsub.f32 %v968, %v1041
    %v1104 = vsub.f32 %v969, %v1041
    %v1105 = vsub.f32 %v970, %v1041
    %v1106 = vmul.f32 %v1042, %v1042
    %v1107 = vmul.f32 %v1043, %v1043
    %v1108 = vmul.f32 %v1044, %v1044
    %v1109 = vmul.f32 %v1045, %v1045
    %v1110 = vmul.f32 %v1046, %v1046
    %v1111 = vmul.f32 %v1047, %v1047
    %v1112 = vmul.f32 %v1048, %v1048
    %v1113 = vmul.f32 %v1049, %v1049
    %v1114 = vmul.f32 %v1050, %v1050
    %v1115 = vmul.f32 %v1051, %v1051
    %v1116 = vmul.f32 %v1052, %v1052
    %v1117 = vmul.f32 %v1053, %v1053
    %v1118 = vmul.f32 %v1054, %v1054
    %v1119 = vmul.f32 %v1055, %v1055
    %v1120 = vmul.f32 %v1056, %v1056
    %v1121 = vmul.f32 %v1057, %v1057
    %v1122 = vmul.f32 %v1058, %v1058
    %v1123 = vmul.f32 %v1059, %v1059
    %v1124 = vmul.f32 %v1060, %v1060
    %v1125 = vmul.f32 %v1061, %v1061
    %v1126 = vmul.f32 %v1062, %v1062
    %v1127 = vmul.f32 %v1063, %v1063
    %v1128 = vmul.f32 %v1064, %v1064
    %v1129 = vmul.f32 %v1065, %v1065
    %v1130 = vmul.f32 %v1066, %v1066
    %v1131 = vmul.f32 %v1067, %v1067
    %v1132 = vmul.f32 %v1068, %v1068
    %v1133 = vmul.f32 %v1069, %v1069
    %v1134 = vmul.f32 %v1070, %v1070
    %v1135 = vmul.f32 %v1071, %v1071
    %v1136 = vmul.f32 %v1072, %v1072
    %v1137 = vmul.f32 %v1073, %v1073
    %v1138 = vmul.f32 %v1074, %v1074
    %v1139 = vmul.f32 %v1075, %v1075
    %v1140 = vmul.f32 %v1076, %v1076
    %v1141 = vmul.f32 %v1077, %v1077
    %v1142 = vmul.f32 %v1078, %v1078
    %v1143 = vmul.f32 %v1079, %v1079
    %v1144 = vmul.f32 %v1080, %v1080
    %v1145 = vmul.f32 %v1081, %v1081
    %v1146 = vmul.f32 %v1082, %v1082
    %v1147 = vmul.f32 %v1083, %v1083
    %v1148 = vmul.f32 %v1084, %v1084
    %v1149 = vmul.f32 %v1085, %v1085
    %v1150 = vmul.f32 %v1086, %v1086
    %v1151 = vmul.f32 %v1087, %v1087
    %v1152 = vmul.f32 %v1088, %v1088
    %v1153 = vmul.f32 %v1089, %v1089
    %v1154 = vmul.f32 %v1090, %v1090
    %v1155 = vmul.f32 %v1091, %v1091
    %v1156 = vmul.f32 %v1092, %v1092
    %v1157 = vmul.f32 %v1093, %v1093
    %v1158 = vmul.f32 %v1094, %v1094
    %v1159 = vmul.f32 %v1095, %v1095
    %v1160 = vmul.f32 %v1096, %v1096
    %v1161 = vmul.f32 %v1097, %v1097
    %v1162 = vmul.f32 %v1098, %v1098
    %v1163 = vmul.f32 %v1099, %v1099
    %v1164 = vmul.f32 %v1100, %v1100
    %v1165 = vmul.f32 %v1101, %v1101
    %v1166 = vmul.f32 %v1102, %v1102
    %v1167 = vmul.f32 %v1103, %v1103
    %v1168 = vmul.f32 %v1104, %v1104
    %v1169 = vmul.f32 %v1105, %v1105
    %v1170 = vadd.f32 %v1106, %v1107
    %v1171 = vadd.f32 %v1170, %v1108
    %v1172 = vadd.f32 %v1171, %v1109
    %v1173 = vadd.f32 %v1172, %v1110
    %v1174 = vadd.f32 %v1173, %v1111
    %v1175 = vadd.f32 %v1174, %v1112
    %v1176 = vadd.f32 %v1175, %v1113
    %v1177 = vadd.f32 %v1176, %v1114
    %v1178 = vadd.f32 %v1177, %v1115
    %v1179 = vadd.f32 %v1178, %v1116
    %v1180 = vadd.f32 %v1179, %v1117
    %v1181 = vadd.f32 %v1180, %v1118
    %v1182 = vadd.f32 %v1181, %v1119
    %v1183 = vadd.f32 %v1182, %v1120
    %v1184 = vadd.f32 %v1183, %v1121
    %v1185 = vadd.f32 %v1184, %v1122
    %v1186 = vadd.f32 %v1185, %v1123
    %v1187 = vadd.f32 %v1186, %v1124
    %v1188 = vadd.f32 %v1187, %v1125
    %v1189 = vadd.f32 %v1188, %v1126
    %v1190 = vadd.f32 %v1189, %v1127
    %v1191 = vadd.f32 %v1190, %v1128
    %v1192 = vadd.f32 %v1191, %v1129
    %v1193 = vadd.f32 %v1192, %v1130
    %v1194 = vadd.f32 %v1193, %v1131
    %v1195 = vadd.f32 %v1194, %v1132
    %v1196 = vadd.f32 %v1195, %v1133
    %v1197 = vadd.f32 %v1196, %v1134
    %v1198 = vadd.f32 %v1197, %v1135
    %v1199 = vadd.f32 %v1198, %v1136
    %v1200 = vadd.f32 %v1199, %v1137
    %v1201 = vadd.f32 %v1200, %v1138
    %v1202 = vadd.f32 %v1201, %v1139
    %v1203 = vadd.f32 %v1202, %v1140
    %v1204 = vadd.f32 %v1203, %v1141
    %v1205 = vadd.f32 %v1204, %v1142
    %v1206 = vadd.f32 %v1205, %v1143
    %v1207 = vadd.f32 %v1206, %v1144
    %v1208 = vadd.f32 %v1207, %v1145
    %v1209 = vadd.f32 %v1208, %v1146
    %v1210 = vadd.f32 %v1209, %v1147
    %v1211 = vadd.f32 %v1210, %v1148
    %v1212 = vadd.f32 %v1211, %v1149
    %v1213 = vadd.f32 %v1212, %v1150
    %v1214 = vadd.f32 %v1213, %v1151
    %v1215 = vadd.f32 %v1214, %v1152
    %v1216 = vadd.f32 %v1215, %v1153
    %v1217 = vadd.f32 %v1216, %v1154
    %v1218 = vadd.f32 %v1217, %v1155
    %v1219 = vadd.f32 %v1218, %v1156
    %v1220 = vadd.f32 %v1219, %v1157
    %v1221 = vadd.f32 %v1220, %v1158
    %v1222 = vadd.f32 %v1221, %v1159
    %v1223 = vadd.f32 %v1222, %v1160
    %v1224 = vadd.f32 %v1223, %v1161
    %v1225 = vadd.f32 %v1224, %v1162
    %v1226 = vadd.f32 %v1225, %v1163
    %v1227 = vadd.f32 %v1226, %v1164
    %v1228 = vadd.f32 %v1227, %v1165
    %v1229 = vadd.f32 %v1228, %v1166
    %v1230 = vadd.f32 %v1229, %v1167
    %v1231 = vadd.f32 %v1230, %v1168
    %v1232 = vadd.f32 %v1231, %v1169
    %v1233 = vrot.slane %v1232, 4
    %v1234 = vadd.f32 %v1232, %v1233
    %v1235 = vrot.slane %v1234, 2
    %v1236 = vadd.f32 %v1234, %v1235
    %v1237 = vrot.slane %v1236, 1
    %v1238 = vadd.f32 %v1236, %v1237
    %v1239 = vmul.f32 %v1238, %v1040
    %v1240 = vadd.f32 %v1239, 1e-05
    %v1241 = vrsqrt.pop %v1240
    %v1242 = vmul.f32 %v1042, %v1241
    %v1243 = vmul.f32 %v1043, %v1241
    %v1244 = vmul.f32 %v1044, %v1241
    %v1245 = vmul.f32 %v1045, %v1241
    %v1246 = vmul.f32 %v1046, %v1241
    %v1247 = vmul.f32 %v1047, %v1241
    %v1248 = vmul.f32 %v1048, %v1241
    %v1249 = vmul.f32 %v1049, %v1241
    %v1250 = vmul.f32 %v1050, %v1241
    %v1251 = vmul.f32 %v1051, %v1241
    %v1252 = vmul.f32 %v1052, %v1241
    %v1253 = vmul.f32 %v1053, %v1241
    %v1254 = vmul.f32 %v1054, %v1241
    %v1255 = vmul.f32 %v1055, %v1241
    %v1256 = vmul.f32 %v1056, %v1241
    %v1257 = vmul.f32 %v1057, %v1241
    %v1258 = vmul.f32 %v1058, %v1241
    %v1259 = vmul.f32 %v1059, %v1241
    %v1260 = vmul.f32 %v1060, %v1241
    %v1261 = vmul.f32 %v1061, %v1241
    %v1262 = vmul.f32 %v1062, %v1241
    %v1263 = vmul.f32 %v1063, %v1241
    %v1264 = vmul.f32 %v1064, %v1241
    %v1265 = vmul.f32 %v1065, %v1241
    %v1266 = vmul.f32 %v1066, %v1241
    %v1267 = vmul.f32 %v1067, %v1241
    %v1268 = vmul.f32 %v1068, %v1241
    %v1269 = vmul.f32 %v1069, %v1241
    %v1270 = vmul.f32 %v1070, %v1241
    %v1271 = vmul.f32 %v1071, %v1241
    %v1272 = vmul.f32 %v1072, %v1241
    %v1273 = vmul.f32 %v1073, %v1241
    %v1274 = vmul.f32 %v1074, %v1241
    %v1275 = vmul.f32 %v1075, %v1241
    %v1276 = vmul.f32 %v1076, %v1241
    %v1277 = vmul.f32 %v1077, %v1241
    %v1278 = vmul.f32 %v1078, %v1241
    %v1279 = vmul.f32 %v1079, %v1241
    %v1280 = vmul.f32 %v1080, %v1241
    %v1281 = vmul.f32 %v1081, %v1241
    %v1282 = vmul.f32 %v1082, %v1241
    %v1283 = vmul.f32 %v1083, %v1241
    %v1284 = vmul.f32 %v1084, %v1241
    %v1285 = vmul.f32 %v1085, %v1241
    %v1286 = vmul.f32 %v1086, %v1241
    %v1287 = vmul.f32 %v1087, %v1241
    %v1288 = vmul.f32 %v1088, %v1241
    %v1289 = vmul.f32 %v1089, %v1241
    %v1290 = vmul.f32 %v1090, %v1241
    %v1291 = vmul.f32 %v1091, %v1241
    %v1292 = vmul.f32 %v1092, %v1241
    %v1293 = vmul.f32 %v1093, %v1241
    %v1294 = vmul.f32 %v1094, %v1241
    %v1295 = vmul.f32 %v1095, %v1241
    %v1296 = vmul.f32 %v1096, %v1241
    %v1297 = vmul.f32 %v1097, %v1241
    %v1298 = vmul.f32 %v1098, %v1241
    %v1299 = vmul.f32 %v1099, %v1241
    %v1300 = vmul.f32 %v1100, %v1241
    %v1301 = vmul.f32 %v1101, %v1241
    %v1302 = vmul.f32 %v1102, %v1241
    %v1303 = vmul.f32 %v1103, %v1241
    %v1304 = vmul.f32 %v1104, %v1241
    %v1305 = vmul.f32 %v1105, %v1241
    %1306 = vst [vmem:[%s2] sm:$0xff] %v1242
    %1307 = vst [vmem:[%s2 + $0x8] sm:$0xff] %v1243
    %1308 = vst [vmem:[%s2 + $0x10] sm:$0xff] %v1244
    %1309 = vst [vmem:[%s2 + $0x18] sm:$0xff] %v1245
    %1310 = vst [vmem:[%s2 + $0x20] sm:$0xff] %v1246
    %1311 = vst [vmem:[%s2 + $0x28] sm:$0xff] %v1247
    %1312 = vst [vmem:[%s2 + $0x30] sm:$0xff] %v1248
    %1313 = vst [vmem:[%s2 + $0x38] sm:$0xff] %v1249
    %1314 = vst [vmem:[%s2 + $0x40] sm:$0xff] %v1250
    %1315 = vst [vmem:[%s2 + $0x48] sm:$0xff] %v1251
    %1316 = vst [vmem:[%s2 + $0x50] sm:$0xff] %v1252
    %1317 = vst [vmem:[%s2 + $0x58] sm:$0xff] %v1253
    %1318 = vst [vmem:[%s2 + $0x60] sm:$0xff] %v1254
    %1319 = vst [vmem:[%s2 + $0x68] sm:$0xff] %v1255
    %1320 = vst [vmem:[%s2 + $0x70] sm:$0xff] %v1256
    %1321 = vst [vmem:[%s2 + $0x78] sm:$0xff] %v1257
    %1322 = vst [vmem:[%s2 + $0x80] sm:$0xff] %v1258
    %1323 = vst [vmem:[%s2 + $0x88] sm:$0xff] %v1259
    %1324 = vst [vmem:[%s2 + $0x90] sm:$0xff] %v1260
    %1325 = vst [vmem:[%s2 + $0x98] sm:$0xff] %v1261
    %1326 = vst [vmem:[%s2 + $0xa0] sm:$0xff] %v1262
    %1327 = vst [vmem:[%s2 + $0xa8] sm:$0xff] %v1263
    %1328 = vst [vmem:[%s2 + $0xb0] sm:$0xff] %v1264
    %1329 = vst [vmem:[%s2 + $0xb8] sm:$0xff] %v1265
    %1330 = vst [vmem:[%s2 + $0xc0] sm:$0xff] %v1266
    %1331 = vst [vmem:[%s2 + $0xc8] sm:$0xff] %v1267
    %1332 = vst [vmem:[%s2 + $0xd0] sm:$0xff] %v1268
    %1333 = vst [vmem:[%s2 + $0xd8] sm:$0xff] %v1269
    %1334 = vst [vmem:[%s2 + $0xe0] sm:$0xff] %v1270
    %1335 = vst [vmem:[%s2 + $0xe8] sm:$0xff] %v1271
    %1336 = vst [vmem:[%s2 + $0xf0] sm:$0xff] %v1272
    %1337 = vst [vmem:[%s2 + $0xf8] sm:$0xff] %v1273
    %1338 = vst [vmem:[%s2 + $0x100] sm:$0xff] %v1274
    %1339 = vst [vmem:[%s2 + $0x108] sm:$0xff] %v1275
    %1340 = vst [vmem:[%s2 + $0x110] sm:$0xff] %v1276
    %1341 = vst [vmem:[%s2 + $0x118] sm:$0xff] %v1277
    %1342 = vst [vmem:[%s2 + $0x120] sm:$0xff] %v1278
    %1343 = vst [vmem:[%s2 + $0x128] sm:$0xff] %v1279
    %1344 = vst [vmem:[%s2 + $0x130] sm:$0xff] %v1280
    %1345 = vst [vmem:[%s2 + $0x138] sm:$0xff] %v1281
    %1346 = vst [vmem:[%s2 + $0x140] sm:$0xff] %v1282
    %1347 = vst [vmem:[%s2 + $0x148] sm:$0xff] %v1283
    %1348 = vst [vmem:[%s2 + $0x150] sm:$0xff] %v1284
    %1349 = vst [vmem:[%s2 + $0x158] sm:$0xff] %v1285
    %1350 = vst [vmem:[%s2 + $0x160] sm:$0xff] %v1286
    %1351 = vst [vmem:[%s2 + $0x168] sm:$0xff] %v1287
    %1352 = vst [vmem:[%s2 + $0x170] sm:$0xff] %v1288
    %1353 = vst [vmem:[%s2 + $0x178] sm:$0xff] %v1289
    %1354 = vst [vmem:[%s2 + $0x180] sm:$0xff] %v1290
    %1355 = vst [vmem:[%s2 + $0x188] sm:$0xff] %v1291
    %1356 = vst [vmem:[%s2 + $0x190] sm:$0xff] %v1292
    %1357 = vst [vmem:[%s2 + $0x198] sm:$0xff] %v1293
    %1358 = vst [vmem:[%s2 + $0x1a0] sm:$0xff] %v1294
    %1359 = vst [vmem:[%s2 + $0x1a8] sm:$0xff] %v1295
    %1360 = vst [vmem:[%s2 + $0x1b0] sm:$0xff] %v1296
    %1361 = vst [vmem:[%s2 + $0x1b8] sm:$0xff] %v1297
    %1362 = vst [vmem:[%s2 + $0x1c0] sm:$0xff] %v1298
    %1363 = vst [vmem:[%s2 + $0x1c8] sm:$0xff] %v1299
    %1364 = vst [vmem:[%s2 + $0x1d0] sm:$0xff] %v1300
    %1365 = vst [vmem:[%s2 + $0x1d8] sm:$0xff] %v1301
    %1366 = vst [vmem:[%s2 + $0x1e0] sm:$0xff] %v1302
    %1367 = vst [vmem:[%s2 + $0x1e8] sm:$0xff] %v1303
    %1368 = vst [vmem:[%s2 + $0x1f0] sm:$0xff] %v1304
    %1369 = vst [vmem:[%s2 + $0x1f8] sm:$0xff] %v1305
  $region17: #{fused_matmul.1} parent=0 // pred_fallthru
    _
  // Predicated region
  $region18: #{fused_matmul.1} parent=0 // pred_check
    _
  $region19: #{fused_matmul.1} parent=0 // pred_check_branch
    %1371 = sbr.rel (0) target = $region21
  $region20: #{fused_matmul.1} parent=0 // pred_region
    _
  $region21: #{fused_matmul.1} parent=0 // pred_fallthru
    _
  // Predicated region
  $region22: #{fused_matmul.1} parent=0 // pred_check
    _
  $region23: #{fused_matmul.1} parent=0 // pred_check_branch
    %1373 = sbr.rel (0) target = $region25
  $region24: #{fused_matmul.1} parent=0 // pred_region
    _
  $region25: #{fused_matmul.1} parent=0 // pred_fallthru
    _

</llo_original>
